<compile_context>
chip_gen: v7x
topology: tpu7x:2x2x1
jax: 0.10.0
libtpu: 0.0.40
codegen_flags: <defaults>
</compile_context>

<pallas_src>
import functools

import jax
import jax.numpy as jnp
from jax.experimental import pallas as pl
from jax.experimental.pallas import tpu as pltpu


def _round_up(n, m):
    return ((n + m - 1) // m) * m


def _round_down_128(n):
    return max(128, (n // 128) * 128)


def _ffn_kernel(x_ref, w1_ref, b1_ref, w2_ref, b2_ref, o_ref, acc_ref):
    k = pl.program_id(1)

    @pl.when(k == 0)
    def _():
        acc_ref[...] = jnp.zeros_like(acc_ref)

    # Linear 1, hidden chunk: (tm, E) @ (E, th) on the MXU (bf16 x bf16 -> f32 acc).
    h = jnp.dot(x_ref[...], w1_ref[...],
                preferred_element_type=jnp.float32) + b1_ref[...]

    # tanh-GELU exactly as in the PyTorch module, computed in f32 (VPU + EUP tanh).
    c = jnp.float32(0.7978845608028654)  # sqrt(2 / pi)
    g = 0.5 * h * (1.0 + jnp.tanh(c * (h + 0.044715 * (h * h * h))))

    # Linear 2 partial product, accumulated over hidden chunks in f32 VMEM scratch.
    acc_ref[...] += jnp.dot(g.astype(w2_ref.dtype), w2_ref[...],
                            preferred_element_type=jnp.float32)

    @pl.when(k == pl.num_programs(1) - 1)
    def _():
        o_ref[...] = (acc_ref[...] + b2_ref[...]).astype(o_ref.dtype)


@functools.partial(jax.jit, static_argnames=("tm", "th", "compute_dtype"))
def feed_forward(x, w1, b1, w2, b2, *, tm=512, th=512, compute_dtype=jnp.bfloat16):
    """x: (batch, seq, emb_dim). Returns same shape and dtype as x."""
    B, S, E = x.shape
    H = w1.shape[1]  # 4 * emb_dim
    M = B * S

    out_dtype = x.dtype
    cbytes = jnp.dtype(compute_dtype).itemsize
    obytes = jnp.dtype(out_dtype).itemsize

    # ---- tile selection: multiples of 128 (full MXU tiles, unmasked stores) ----
    tm = min(_round_down_128(tm), _round_up(M, 128))
    th = min(_round_down_128(th), _round_up(H, 128))

    # Fit a cross-generation VMEM budget (v7x: 64 MiB physical). Shrink th first
    # (doesn't change total weight traffic), then tm.
    def vmem_est(tm_, th_):
        return (2 * (tm_ * E + E * th_ + th_ * E) * cbytes   # x, W1, W2 (double-buffered)
                + 2 * tm_ * E * obytes                       # output (double-buffered)
                + tm_ * E * 4                                # f32 accumulator
                + 2 * (th_ + E) * 4 * 2)                     # biases (f32)

    _BUDGET = 44 * 1024 * 1024
    while vmem_est(tm, th) > _BUDGET and th > 128:
        th = _round_down_128(th // 2)
    while vmem_est(tm, th) > _BUDGET and tm > 128:
        tm = _round_down_128(tm // 2)

    m_pad = _round_up(M, tm)
    # Ensure >= 2 blocks on the "parallel" M axis when possible (v7x: 2 TensorCores).
    if m_pad // tm == 1 and M > 128:
        tm_half = _round_up((M + 1) // 2, 128)
        if tm_half < tm:
            tm = tm_half
            m_pad = _round_up(M, tm)
    h_pad = _round_up(H, th)

    # ---- operands: bf16 matmul inputs, f32 biases, zero-padding where needed ----
    x2d = x.reshape(M, E)
    if m_pad != M:
        x2d = jnp.pad(x2d, ((0, m_pad - M), (0, 0)))
    x2d = x2d.astype(compute_dtype)
    w1c = w1.astype(compute_dtype)
    w2c = w2.astype(compute_dtype)
    b1f = b1.astype(jnp.float32)
    b2f = b2.astype(jnp.float32)
    if h_pad != H:
        w1c = jnp.pad(w1c, ((0, 0), (0, h_pad - H)))
        w2c = jnp.pad(w2c, ((0, h_pad - H), (0, 0)))
        b1f = jnp.pad(b1f, ((0, h_pad - H),))
    b1_2d = b1f.reshape(1, h_pad)
    b2_2d = b2f.reshape(1, E)

    grid_m = m_pad // tm
    grid = (grid_m, h_pad // th)

    cost = pl.CostEstimate(
        flops=4 * m_pad * E * h_pad,                        # two matmuls
        transcendentals=m_pad * h_pad,                      # tanh in GELU
        bytes_accessed=(cbytes * m_pad * E                  # x read once
                        + obytes * m_pad * E                # out written once
                        + grid_m * cbytes * 2 * E * h_pad   # W1/W2 re-streamed per M tile
                        + grid_m * 4 * (h_pad + E)),        # biases per M tile
    )

    out2d = pl.pallas_call(
        _ffn_kernel,
        out_shape=jax.ShapeDtypeStruct((m_pad, E), out_dtype),
        grid_spec=pltpu.PrefetchScalarGridSpec(
            num_scalar_prefetch=0,
            grid=grid,
            in_specs=[
                pl.BlockSpec((tm, E), lambda i, k: (i, 0)),   # x tile (resident over k)
                pl.BlockSpec((E, th), lambda i, k: (0, k)),   # W1 hidden chunk
                pl.BlockSpec((1, th), lambda i, k: (0, k)),   # b1 hidden chunk
                pl.BlockSpec((th, E), lambda i, k: (k, 0)),   # W2 hidden chunk
                pl.BlockSpec((1, E), lambda i, k: (0, 0)),    # b2 (tiny, constant)
            ],
            out_specs=pl.BlockSpec((tm, E), lambda i, k: (i, 0)),
            scratch_shapes=[pltpu.VMEM((tm, E), jnp.float32)],
        ),
        compiler_params=pltpu.CompilerParams(
            dimension_semantics=("parallel", "arbitrary"),
            vmem_limit_bytes=56 * 1024 * 1024,   # above 16/32 MiB scoped defaults, < v7x 64 MiB
        ),
        cost_estimate=cost,
    )(x2d, w1c, b1_2d, w2c, b2_2d)

    if m_pad != M:
        out2d = out2d[:M]
    return out2d.reshape(B, S, E)


def _reference(x, w1, b1, w2, b2):
    h = x @ w1 + b1
    g = 0.5 * h * (1.0 + jnp.tanh(jnp.sqrt(2.0 / jnp.pi) * (h + 0.044715 * h ** 3)))
    return g @ w2 + b2


if __name__ == "__main__":
    # Small but lane-dense demo: cfg['emb_dim'] = 128 -> hidden = 4*128 = 512.
    batch, seq, emb_dim = 2, 8, 128
    hidden = 4 * emb_dim

    key = jax.random.PRNGKey(0)
    kx, kw1, kb1, kw2, kb2 = jax.random.split(key, 5)

    x = jax.random.normal(kx, (batch, seq, emb_dim), dtype=jnp.float32)

    # PyTorch Linear params (W: (out,in), b: (out,)) stored transposed as
    # (in, out) for the kernel's x @ W convention.
    w1 = jax.random.normal(kw1, (emb_dim, hidden), dtype=jnp.float32) * 0.02
    b1 = jax.random.normal(kb1, (hidden,), dtype=jnp.float32) * 0.02
    w2 = jax.random.normal(kw2, (hidden, emb_dim), dtype=jnp.float32) * 0.02
    b2 = jax.random.normal(kb2, (emb_dim,), dtype=jnp.float32) * 0.02

    out = feed_forward(x, w1, b1, w2, b2)
    out = jax.block_until_ready(out)

    ref = _reference(x, w1, b1, w2, b2)
    assert out.shape == (batch, seq, emb_dim)
    # bf16 matmul inputs + f32 accumulation -> loose-ish tolerance vs f32 reference.
    assert jnp.allclose(out, ref, atol=1e-2, rtol=1e-2), (
        float(jnp.max(jnp.abs(out - ref))))

    print("KERNEL_OK")
</pallas_src>

<mosaic_0001>
module attributes {stable_mosaic.version = 11 : i64} {
  func.func @_ffn_kernel(%arg0: i32, %arg1: i32, %arg2: memref<128x128xbf16, #tpu.memory_space<vmem>>, %arg3: memref<128x512xbf16, #tpu.memory_space<vmem>>, %arg4: memref<1x512xf32, #tpu.memory_space<vmem>>, %arg5: memref<512x128xbf16, #tpu.memory_space<vmem>>, %arg6: memref<1x128xf32, #tpu.memory_space<vmem>>, %arg7: memref<128x128xf32, #tpu.memory_space<vmem>>, %arg8: memref<128x128xf32, #tpu.memory_space<vmem>>) attributes {dimension_semantics = [#tpu.dimension_semantics<parallel>, #tpu.dimension_semantics<arbitrary>], iteration_bounds = array<i64: 1, 1>, scalar_prefetch = 0 : i64, scratch_operands = 1 : i64, tpu.core_type = #tpu.core_type<tc>, window_params = [{transform_indices = @transform_0, window_bounds = array<i64: 128, 128>}, {transform_indices = @transform_1, window_bounds = array<i64: 128, 512>}, {transform_indices = @transform_2, window_bounds = array<i64: 1, 512>}, {transform_indices = @transform_3, window_bounds = array<i64: 512, 128>}, {pipeline_mode = #tpu.pipeline_mode<synchronous>, transform_indices = @transform_4, window_bounds = array<i64: 1, 128>}, {transform_indices = @transform_5, window_bounds = array<i64: 128, 128>}]} {
    %c0_i32 = arith.constant 0 : i32
    %0 = arith.cmpi eq, %arg1, %c0_i32 : i32
    %1 = arith.extui %0 : i1 to i32
    %c0_i32_0 = arith.constant 0 : i32
    %2 = arith.cmpi ne, %1, %c0_i32_0 : i32
    scf.if %2 {
      %cst_19 = arith.constant 0.000000e+00 : f32
      %31 = vector.broadcast %cst_19 : f32 to vector<128x128xf32>
      %c0_20 = arith.constant 0 : index
      %c0_21 = arith.constant 0 : index
      %32 = vector.load %arg8[%c0_20, %c0_21] : memref<128x128xf32, #tpu.memory_space<vmem>>, vector<128x128xf32>
      tpu.vector_store %arg8[%c0_20, %c0_21], %31 {strides = array<i32>} : memref<128x128xf32, #tpu.memory_space<vmem>>, vector<128x128xf32>,
    } else {
    }
    %c0 = arith.constant 0 : index
    %c0_1 = arith.constant 0 : index
    %3 = vector.load %arg2[%c0, %c0_1] : memref<128x128xbf16, #tpu.memory_space<vmem>>, vector<128x128xbf16>
    %c0_2 = arith.constant 0 : index
    %c0_3 = arith.constant 0 : index
    %4 = vector.load %arg3[%c0_2, %c0_3] : memref<128x512xbf16, #tpu.memory_space<vmem>>, vector<128x512xbf16>
    %cst = arith.constant dense<0.000000e+00> : vector<128x512xf32>
    %5 = tpu.matmul %3, %4, %cst {dimension_numbers = #tpu.dot_dimension_numbers<[1], [0], [0], [1], [0, 0, 1, 1], [], []>} : vector<128x128xbf16>, vector<128x512xbf16>, vector<128x512xf32> -> vector<128x512xf32>
    %c0_4 = arith.constant 0 : index
    %c0_5 = arith.constant 0 : index
    %6 = vector.load %arg4[%c0_4, %c0_5] : memref<1x512xf32, #tpu.memory_space<vmem>>, vector<1x512xf32>
    %7 = vector.broadcast %6 : vector<1x512xf32> to vector<128x512xf32>
    %8 = arith.addf %5, %7 : vector<128x512xf32>
    %cst_6 = arith.constant 5.000000e-01 : f32
    %9 = vector.broadcast %cst_6 : f32 to vector<128x512xf32>
    %10 = arith.mulf %9, %8 : vector<128x512xf32>
    %11 = arith.mulf %8, %8 : vector<128x512xf32>
    %12 = arith.mulf %11, %8 : vector<128x512xf32>
    %cst_7 = arith.constant 4.471500e-02 : f32
    %13 = vector.broadcast %cst_7 : f32 to vector<128x512xf32>
    %14 = arith.mulf %13, %12 : vector<128x512xf32>
    %15 = arith.addf %8, %14 : vector<128x512xf32>
    %cst_8 = arith.constant 0.797884583 : f32
    %16 = vector.broadcast %cst_8 : f32 to vector<128x512xf32>
    %17 = arith.mulf %16, %15 : vector<128x512xf32>
    %18 = math.tanh %17 : vector<128x512xf32>
    %cst_9 = arith.constant 1.000000e+00 : f32
    %19 = vector.broadcast %cst_9 : f32 to vector<128x512xf32>
    %20 = arith.addf %19, %18 : vector<128x512xf32>
    %21 = arith.mulf %10, %20 : vector<128x512xf32>
    %c0_10 = arith.constant 0 : index
    %c0_11 = arith.constant 0 : index
    %22 = vector.load %arg8[%c0_10, %c0_11] : memref<128x128xf32, #tpu.memory_space<vmem>>, vector<128x128xf32>
    %23 = arith.truncf %21 : vector<128x512xf32> to vector<128x512xbf16>
    %c0_12 = arith.constant 0 : index
    %c0_13 = arith.constant 0 : index
    %24 = vector.load %arg5[%c0_12, %c0_13] : memref<512x128xbf16, #tpu.memory_space<vmem>>, vector<512x128xbf16>
    %cst_14 = arith.constant dense<0.000000e+00> : vector<128x128xf32>
    %25 = tpu.matmul %23, %24, %cst_14 {dimension_numbers = #tpu.dot_dimension_numbers<[1], [0], [0], [1], [0, 0, 1, 1], [], []>} : vector<128x512xbf16>, vector<512x128xbf16>, vector<128x128xf32> -> vector<128x128xf32>
    %26 = arith.addf %22, %25 : vector<128x128xf32>
    %c0_15 = arith.constant 0 : index
    %c0_16 = arith.constant 0 : index
    %27 = vector.load %arg8[%c0_15, %c0_16] : memref<128x128xf32, #tpu.memory_space<vmem>>, vector<128x128xf32>
    tpu.vector_store %arg8[%c0_15, %c0_16], %26 {strides = array<i32>} : memref<128x128xf32, #tpu.memory_space<vmem>>, vector<128x128xf32>,
    %c0_i32_17 = arith.constant 0 : i32
    %28 = arith.cmpi eq, %arg1, %c0_i32_17 : i32
    %29 = arith.extui %28 : i1 to i32
    %c0_i32_18 = arith.constant 0 : i32
    %30 = arith.cmpi ne, %29, %c0_i32_18 : i32
    scf.if %30 {
      %c0_19 = arith.constant 0 : index
      %c0_20 = arith.constant 0 : index
      %31 = vector.load %arg8[%c0_19, %c0_20] : memref<128x128xf32, #tpu.memory_space<vmem>>, vector<128x128xf32>
      %c0_21 = arith.constant 0 : index
      %c0_22 = arith.constant 0 : index
      %32 = vector.load %arg6[%c0_21, %c0_22] : memref<1x128xf32, #tpu.memory_space<vmem>>, vector<1x128xf32>
      %33 = vector.broadcast %32 : vector<1x128xf32> to vector<128x128xf32>
      %34 = arith.addf %31, %33 : vector<128x128xf32>
      %c0_23 = arith.constant 0 : index
      %c0_24 = arith.constant 0 : index
      %35 = vector.load %arg7[%c0_23, %c0_24] : memref<128x128xf32, #tpu.memory_space<vmem>>, vector<128x128xf32>
      tpu.vector_store %arg7[%c0_23, %c0_24], %34 {strides = array<i32>} : memref<128x128xf32, #tpu.memory_space<vmem>>, vector<128x128xf32>,
    } else {
    }
    return
  }
  func.func @transform_0(%arg0: i32, %arg1: i32) -> (i32, i32) {
    %c0_i32 = arith.constant 0 : i32
    %c0_i32_0 = arith.constant 0 : i32
    return %arg0, %c0_i32 : i32, i32
  }
  func.func @transform_1(%arg0: i32, %arg1: i32) -> (i32, i32) {
    %c0_i32 = arith.constant 0 : i32
    %c0_i32_0 = arith.constant 0 : i32
    return %c0_i32, %arg1 : i32, i32
  }
  func.func @transform_2(%arg0: i32, %arg1: i32) -> (i32, i32) {
    %c0_i32 = arith.constant 0 : i32
    %c0_i32_0 = arith.constant 0 : i32
    return %c0_i32, %arg1 : i32, i32
  }
  func.func @transform_3(%arg0: i32, %arg1: i32) -> (i32, i32) {
    %c0_i32 = arith.constant 0 : i32
    %c0_i32_0 = arith.constant 0 : i32
    return %arg1, %c0_i32 : i32, i32
  }
  func.func @transform_4(%arg0: i32, %arg1: i32) -> (i32, i32) {
    %c0_i32 = arith.constant 0 : i32
    %c0_i32_0 = arith.constant 0 : i32
    %c0_i32_1 = arith.constant 0 : i32
    return %c0_i32, %c0_i32_0 : i32, i32
  }
  func.func @transform_5(%arg0: i32, %arg1: i32) -> (i32, i32) {
    %c0_i32 = arith.constant 0 : i32
    %c0_i32_0 = arith.constant 0 : i32
    return %arg0, %c0_i32 : i32, i32
  }
}

</mosaic_0001>

<llo_original>
// kernel: feed_forward.1
$region0: #{feed_forward.1}
  #allocation0 [shape = 'u32[]', space=smem, size = 0x4, offset = 0x4, fixed_abs, tag = 'smem constant byte address 0x4 - core index']
  #allocation1 [shape = 'u32[144,128]{1,0:T(1,128)}', space=vmem, size = 0x12000, scoped, tag = 'internal scratch']
  #allocation2 [shape = 'f32[128,128]{1,0:T(8,128)}', space=vmem, size = 0x10000, scoped, tag = 'scratch operand']
  %s0 = inlined_call_operand.vmem [shape: bf16[128,128], index: 0, kind: input, shape index: {}]
  %s1 = inlined_call_operand.vmem [shape: bf16[128,512], index: 1, kind: input, shape index: {}]
  %s2 = inlined_call_operand.vmem [shape: f32[1,512], index: 2, kind: input, shape index: {}]
  %s3 = inlined_call_operand.vmem [shape: bf16[512,128], index: 3, kind: input, shape index: {}]
  %s4 = inlined_call_operand.vmem [shape: f32[1,128], index: 4, kind: input, shape index: {}]
  %s5 = inlined_call_operand.vmem [shape: f32[128,128], index: 5, kind: output, shape index: {}]
  %s6 = sld [smem:[#allocation0]]
  $region38: #{feed_forward.1} parent=0
    _
  %s8 = ssub.s32 1, %s6
  %s9 = scalar_select 0, %s8, %s6
  // Predicated region
  $region2: #{feed_forward.1} parent=0 // pred_check
    _
  $region3: #{feed_forward.1} parent=0 // pred_check_branch
    %11 = sbr.rel (0) target = $region5
  $region4: #{feed_forward.1} parent=0 // pred_region
    _
  $region5: #{feed_forward.1} parent=0 // pred_fallthru
    _
  // Predicated region
  $region6: #{feed_forward.1} parent=0 // pred_check
    _
  $region7: #{feed_forward.1} parent=0 // pred_check_branch
    %13 = sbr.rel (0) target = $region9
  $region8: #{feed_forward.1} parent=0 // pred_region
    _
  $region9: #{feed_forward.1} parent=0 // pred_fallthru
    _
  // Predicated region
  $region10: #{feed_forward.1} parent=0 // pred_check
    _
  $region11: #{feed_forward.1} parent=0 // pred_check_branch
    %15 = sbr.rel (0) target = $region13
  $region12: #{feed_forward.1} parent=0 // pred_region
    _
  $region13: #{feed_forward.1} parent=0 // pred_fallthru
    _
  // Predicated region
  $region14: #{feed_forward.1} parent=0 // pred_check
    _
  $region15: #{feed_forward.1} parent=0 // pred_check_branch
    %17 = sbr.rel (0) target = $region17
  $region16: #{feed_forward.1} parent=0 // pred_region
    _
  $region17: #{feed_forward.1} parent=0 // pred_fallthru
    _
  // Predicated region
  $region18: #{feed_forward.1} parent=0 // pred_check
    _
  $region19: #{feed_forward.1} parent=0 // pred_check_branch
    %19 = sbr.rel (0) target = $region21
  $region20: #{feed_forward.1} parent=0 // pred_region
    _
  $region21: #{feed_forward.1} parent=0 // pred_fallthru
    _
  %p21 = scmp.eq.s32.totalorder 0, 0
  // Predicated region
  $region22: #{feed_forward.1} parent=0 // pred_check
    %p22 = pneg %p21
  $region23: #{feed_forward.1} parent=0 // pred_check_branch
    %24 = sbr.rel (%p22) target = $region25
  $region24: #{feed_forward.1} parent=0 // pred_region
    %25 = vst [vmem:[#allocation2] sm:$0xff] 0.0
    %26 = vst [vmem:[#allocation2 + $0x8] sm:$0xff] 0.0
    %27 = vst [vmem:[#allocation2 + $0x10] sm:$0xff] 0.0
    %28 = vst [vmem:[#allocation2 + $0x18] sm:$0xff] 0.0
    %29 = vst [vmem:[#allocation2 + $0x20] sm:$0xff] 0.0
    %30 = vst [vmem:[#allocation2 + $0x28] sm:$0xff] 0.0
    %31 = vst [vmem:[#allocation2 + $0x30] sm:$0xff] 0.0
    %32 = vst [vmem:[#allocation2 + $0x38] sm:$0xff] 0.0
    %33 = vst [vmem:[#allocation2 + $0x40] sm:$0xff] 0.0
    %34 = vst [vmem:[#allocation2 + $0x48] sm:$0xff] 0.0
    %35 = vst [vmem:[#allocation2 + $0x50] sm:$0xff] 0.0
    %36 = vst [vmem:[#allocation2 + $0x58] sm:$0xff] 0.0
    %37 = vst [vmem:[#allocation2 + $0x60] sm:$0xff] 0.0
    %38 = vst [vmem:[#allocation2 + $0x68] sm:$0xff] 0.0
    %39 = vst [vmem:[#allocation2 + $0x70] sm:$0xff] 0.0
    %40 = vst [vmem:[#allocation2 + $0x78] sm:$0xff] 0.0
  $region25: #{feed_forward.1} parent=0 // pred_fallthru
    _
  %v41 = vld [vmem:[%s0] sm:$0xf]
  %v42 = vld [vmem:[%s0 + $0x4] sm:$0xf]
  %v43 = vld [vmem:[%s0 + $0x8] sm:$0xf]
  %v44 = vld [vmem:[%s0 + $0xc] sm:$0xf]
  %v45 = vld [vmem:[%s0 + $0x10] sm:$0xf]
  %v46 = vld [vmem:[%s0 + $0x14] sm:$0xf]
  %v47 = vld [vmem:[%s0 + $0x18] sm:$0xf]
  %v48 = vld [vmem:[%s0 + $0x1c] sm:$0xf]
  %v49 = vld [vmem:[%s0 + $0x20] sm:$0xf]
  %v50 = vld [vmem:[%s0 + $0x24] sm:$0xf]
  %v51 = vld [vmem:[%s0 + $0x28] sm:$0xf]
  %v52 = vld [vmem:[%s0 + $0x2c] sm:$0xf]
  %v53 = vld [vmem:[%s0 + $0x30] sm:$0xf]
  %v54 = vld [vmem:[%s0 + $0x34] sm:$0xf]
  %v55 = vld [vmem:[%s0 + $0x38] sm:$0xf]
  %v56 = vld [vmem:[%s0 + $0x3c] sm:$0xf]
  %v57 = vld [vmem:[%s1] sm:$0xff]
  %v58 = vld [vmem:[%s1 + $0x8] sm:$0xff]
  %v59 = vld [vmem:[%s1 + $0x10] sm:$0xff]
  %v60 = vld [vmem:[%s1 + $0x18] sm:$0xff]
  %v61 = vld [vmem:[%s1 + $0x20] sm:$0xff]
  %v62 = vld [vmem:[%s1 + $0x28] sm:$0xff]
  %v63 = vld [vmem:[%s1 + $0x30] sm:$0xff]
  %v64 = vld [vmem:[%s1 + $0x38] sm:$0xff]
  %v65 = vld [vmem:[%s1 + $0x40] sm:$0xff]
  %v66 = vld [vmem:[%s1 + $0x48] sm:$0xff]
  %v67 = vld [vmem:[%s1 + $0x50] sm:$0xff]
  %v68 = vld [vmem:[%s1 + $0x58] sm:$0xff]
  %v69 = vld [vmem:[%s1 + $0x60] sm:$0xff]
  %v70 = vld [vmem:[%s1 + $0x68] sm:$0xff]
  %v71 = vld [vmem:[%s1 + $0x70] sm:$0xff]
  %v72 = vld [vmem:[%s1 + $0x78] sm:$0xff]
  %v73 = vld [vmem:[%s1 + $0x80] sm:$0xff]
  %v74 = vld [vmem:[%s1 + $0x88] sm:$0xff]
  %v75 = vld [vmem:[%s1 + $0x90] sm:$0xff]
  %v76 = vld [vmem:[%s1 + $0x98] sm:$0xff]
  %v77 = vld [vmem:[%s1 + $0xa0] sm:$0xff]
  %v78 = vld [vmem:[%s1 + $0xa8] sm:$0xff]
  %v79 = vld [vmem:[%s1 + $0xb0] sm:$0xff]
  %v80 = vld [vmem:[%s1 + $0xb8] sm:$0xff]
  %v81 = vld [vmem:[%s1 + $0xc0] sm:$0xff]
  %v82 = vld [vmem:[%s1 + $0xc8] sm:$0xff]
  %v83 = vld [vmem:[%s1 + $0xd0] sm:$0xff]
  %v84 = vld [vmem:[%s1 + $0xd8] sm:$0xff]
  %v85 = vld [vmem:[%s1 + $0xe0] sm:$0xff]
  %v86 = vld [vmem:[%s1 + $0xe8] sm:$0xff]
  %v87 = vld [vmem:[%s1 + $0xf0] sm:$0xff]
  %v88 = vld [vmem:[%s1 + $0xf8] sm:$0xff]
  %v89 = vld [vmem:[%s2] sm:$0xf]
  %v91 = vlaneseq
  %v92 = vshrl.u32 %v91, 7
  %v93 = vsub.s32 0, %v92
  %v94 = vrot.slane %v89, %v93
  %v95 = vlaneseq
  %v96 = vshrl.u32 %v95, 7
  %v97 = vsub.s32 1, %v96
  %v98 = vrot.slane %v89, %v97
  %v99 = vlaneseq
  %v100 = vshrl.u32 %v99, 7
  %v101 = vsub.s32 2, %v100
  %v102 = vrot.slane %v89, %v101
  %v103 = vlaneseq
  %v104 = vshrl.u32 %v103, 7
  %v105 = vsub.s32 3, %v104
  %v106 = vrot.slane %v89, %v105
  %v127 = vunpack.c.l.b16 %v41
  %v128 = vunpack.c.l.b16 %v42
  %v129 = vunpack.c.l.b16 %v43
  %v130 = vunpack.c.l.b16 %v44
  %v131 = vunpack.c.l.b16 %v45
  %v132 = vunpack.c.l.b16 %v46
  %v133 = vunpack.c.l.b16 %v47
  %v134 = vunpack.c.l.b16 %v48
  %v135 = vunpack.c.l.b16 %v49
  %v136 = vunpack.c.l.b16 %v50
  %v137 = vunpack.c.l.b16 %v51
  %v138 = vunpack.c.l.b16 %v52
  %v139 = vunpack.c.l.b16 %v53
  %v140 = vunpack.c.l.b16 %v54
  %v141 = vunpack.c.l.b16 %v55
  %v142 = vunpack.c.l.b16 %v56
  %v143 = vpack.c.b16 %v128, %v127
  %v144 = vpack.c.b16 %v130, %v129
  %v145 = vpack.c.b16 %v132, %v131
  %v146 = vpack.c.b16 %v134, %v133
  %v147 = vpack.c.b16 %v136, %v135
  %v148 = vpack.c.b16 %v138, %v137
  %v149 = vpack.c.b16 %v140, %v139
  %v150 = vpack.c.b16 %v142, %v141
  %v191 = vunpack.c.l.b16 %v57
  %v192 = vunpack.c.h.b16 %v57
  %v193 = vunpack.c.l.b16 %v58
  %v194 = vunpack.c.h.b16 %v58
  %v195 = vunpack.c.l.b16 %v59
  %v196 = vunpack.c.h.b16 %v59
  %v197 = vunpack.c.l.b16 %v60
  %v198 = vunpack.c.h.b16 %v60
  %v199 = vunpack.c.l.b16 %v61
  %v200 = vunpack.c.h.b16 %v61
  %v201 = vunpack.c.l.b16 %v62
  %v202 = vunpack.c.h.b16 %v62
  %v203 = vunpack.c.l.b16 %v63
  %v204 = vunpack.c.h.b16 %v63
  %v205 = vunpack.c.l.b16 %v64
  %v206 = vunpack.c.h.b16 %v64
  %v207 = vunpack.c.l.b16 %v65
  %v208 = vunpack.c.h.b16 %v65
  %v209 = vunpack.c.l.b16 %v66
  %v210 = vunpack.c.h.b16 %v66
  %v211 = vunpack.c.l.b16 %v67
  %v212 = vunpack.c.h.b16 %v67
  %v213 = vunpack.c.l.b16 %v68
  %v214 = vunpack.c.h.b16 %v68
  %v215 = vunpack.c.l.b16 %v69
  %v216 = vunpack.c.h.b16 %v69
  %v217 = vunpack.c.l.b16 %v70
  %v218 = vunpack.c.h.b16 %v70
  %v219 = vunpack.c.l.b16 %v71
  %v220 = vunpack.c.h.b16 %v71
  %v221 = vunpack.c.l.b16 %v72
  %v222 = vunpack.c.h.b16 %v72
  %v223 = vunpack.c.l.b16 %v73
  %v224 = vunpack.c.h.b16 %v73
  %v225 = vunpack.c.l.b16 %v74
  %v226 = vunpack.c.h.b16 %v74
  %v227 = vunpack.c.l.b16 %v75
  %v228 = vunpack.c.h.b16 %v75
  %v229 = vunpack.c.l.b16 %v76
  %v230 = vunpack.c.h.b16 %v76
  %v231 = vunpack.c.l.b16 %v77
  %v232 = vunpack.c.h.b16 %v77
  %v233 = vunpack.c.l.b16 %v78
  %v234 = vunpack.c.h.b16 %v78
  %v235 = vunpack.c.l.b16 %v79
  %v236 = vunpack.c.h.b16 %v79
  %v237 = vunpack.c.l.b16 %v80
  %v238 = vunpack.c.h.b16 %v80
  %v239 = vunpack.c.l.b16 %v81
  %v240 = vunpack.c.h.b16 %v81
  %v241 = vunpack.c.l.b16 %v82
  %v242 = vunpack.c.h.b16 %v82
  %v243 = vunpack.c.l.b16 %v83
  %v244 = vunpack.c.h.b16 %v83
  %v245 = vunpack.c.l.b16 %v84
  %v246 = vunpack.c.h.b16 %v84
  %v247 = vunpack.c.l.b16 %v85
  %v248 = vunpack.c.h.b16 %v85
  %v249 = vunpack.c.l.b16 %v86
  %v250 = vunpack.c.h.b16 %v86
  %v251 = vunpack.c.l.b16 %v87
  %v252 = vunpack.c.h.b16 %v87
  %v253 = vunpack.c.l.b16 %v88
  %v254 = vunpack.c.h.b16 %v88
  %v255 = vpack.c.b16 %v195, %v191
  %v256 = vpack.c.b16 %v196, %v192
  %v257 = vpack.c.b16 %v197, %v193
  %v258 = vpack.c.b16 %v198, %v194
  %v259 = vpack.c.b16 %v203, %v199
  %v260 = vpack.c.b16 %v204, %v200
  %v261 = vpack.c.b16 %v205, %v201
  %v262 = vpack.c.b16 %v206, %v202
  %v263 = vpack.c.b16 %v211, %v207
  %v264 = vpack.c.b16 %v212, %v208
  %v265 = vpack.c.b16 %v213, %v209
  %v266 = vpack.c.b16 %v214, %v210
  %v267 = vpack.c.b16 %v219, %v215
  %v268 = vpack.c.b16 %v220, %v216
  %v269 = vpack.c.b16 %v221, %v217
  %v270 = vpack.c.b16 %v222, %v218
  %v271 = vpack.c.b16 %v227, %v223
  %v272 = vpack.c.b16 %v228, %v224
  %v273 = vpack.c.b16 %v229, %v225
  %v274 = vpack.c.b16 %v230, %v226
  %v275 = vpack.c.b16 %v235, %v231
  %v276 = vpack.c.b16 %v236, %v232
  %v277 = vpack.c.b16 %v237, %v233
  %v278 = vpack.c.b16 %v238, %v234
  %v279 = vpack.c.b16 %v243, %v239
  %v280 = vpack.c.b16 %v244, %v240
  %v281 = vpack.c.b16 %v245, %v241
  %v282 = vpack.c.b16 %v246, %v242
  %v283 = vpack.c.b16 %v251, %v247
  %v284 = vpack.c.b16 %v252, %v248
  %v285 = vpack.c.b16 %v253, %v249
  %v286 = vpack.c.b16 %v254, %v250
  %319 = vmatprep.subr.bf16.mxu0 %v256
  %320 = vmatpush1.bf16.msra.mxu0 %v255
  %321 = vmatprep.subr.bf16.mxu0 %v260
  %322 = vmatpush1.bf16.msra.mxu0 %v259
  %323 = vmatprep.subr.bf16.mxu0 %v264
  %324 = vmatpush1.bf16.msra.mxu0 %v263
  %325 = vmatprep.subr.bf16.mxu0 %v268
  %326 = vmatpush1.bf16.msra.mxu0 %v267
  %327 = vmatprep.subr.bf16.mxu0 %v272
  %328 = vmatpush1.bf16.msra.mxu0 %v271
  %329 = vmatprep.subr.bf16.mxu0 %v276
  %330 = vmatpush1.bf16.msra.mxu0 %v275
  %331 = vmatprep.subr.bf16.mxu0 %v280
  %332 = vmatpush1.bf16.msra.mxu0 %v279
  %333 = vmatprep.subr.bf16.mxu0 %v284
  %334 = vmatpush1.bf16.msra.mxu0 %v283
  %335 = vmatprep.subr.bf16.mxu0 0
  %336 = vmatpush1.bf16.msra.mxu0 0
  %337 = vmatprep.subr.bf16.mxu0 0
  %338 = vmatpush1.bf16.msra.mxu0 0
  %339 = vmatprep.subr.bf16.mxu0 0
  %340 = vmatpush1.bf16.msra.mxu0 0
  %341 = vmatprep.subr.bf16.mxu0 0
  %342 = vmatpush1.bf16.msra.mxu0 0
  %343 = vmatprep.subr.bf16.mxu0 0
  %344 = vmatpush1.bf16.msra.mxu0 0
  %345 = vmatprep.subr.bf16.mxu0 0
  %346 = vmatpush1.bf16.msra.mxu0 0
  %347 = vmatprep.subr.bf16.mxu0 0
  %348 = vmatpush1.bf16.msra.mxu0 0
  %349 = vmatprep.subr.bf16.mxu0 0
  %350 = vmatpush1.bf16.msra.mxu0 0
  %351 = vmatprep.mubr.bf16.mxu0 0
  %352 = vmatmul.mubr.bf16.gmra.mrb[0].mxu0 %v143
  %v353 = vpop.f32.mrb[0].mxu0
  %v354 = vadd.f32 %v94, %v353
  %v355 = vpop.f32.mrb[0].mxu0
  %v356 = vadd.f32 %v98, %v355
  %v357 = vpop.f32.mrb[0].mxu0
  %v358 = vadd.f32 %v94, %v357
  %v359 = vpop.f32.mrb[0].mxu0
  %v360 = vadd.f32 %v98, %v359
  %361 = vmatprep.mubr.bf16.mxu0 0
  %362 = vmatmul.mubr.bf16.gmra.mrb[0].mxu0 %v144
  %v363 = vpop.f32.mrb[0].mxu0
  %v364 = vadd.f32 %v94, %v363
  %v365 = vpop.f32.mrb[0].mxu0
  %v366 = vadd.f32 %v98, %v365
  %v367 = vpop.f32.mrb[0].mxu0
  %v368 = vadd.f32 %v94, %v367
  %v369 = vpop.f32.mrb[0].mxu0
  %v370 = vadd.f32 %v98, %v369
  %371 = vmatprep.mubr.bf16.mxu0 0
  %372 = vmatmul.mubr.bf16.gmra.mrb[0].mxu0 %v145
  %v373 = vpop.f32.mrb[0].mxu0
  %v374 = vadd.f32 %v94, %v373
  %v375 = vpop.f32.mrb[0].mxu0
  %v376 = vadd.f32 %v98, %v375
  %v377 = vpop.f32.mrb[0].mxu0
  %v378 = vadd.f32 %v94, %v377
  %v379 = vpop.f32.mrb[0].mxu0
  %v380 = vadd.f32 %v98, %v379
  %381 = vmatprep.mubr.bf16.mxu0 0
  %382 = vmatmul.mubr.bf16.gmra.mrb[0].mxu0 %v146
  %v383 = vpop.f32.mrb[0].mxu0
  %v384 = vadd.f32 %v94, %v383
  %v385 = vpop.f32.mrb[0].mxu0
  %v386 = vadd.f32 %v98, %v385
  %v387 = vpop.f32.mrb[0].mxu0
  %v388 = vadd.f32 %v94, %v387
  %v389 = vpop.f32.mrb[0].mxu0
  %v390 = vadd.f32 %v98, %v389
  %391 = vmatprep.mubr.bf16.mxu0 0
  %392 = vmatmul.mubr.bf16.gmra.mrb[0].mxu0 %v147
  %v393 = vpop.f32.mrb[0].mxu0
  %v394 = vadd.f32 %v94, %v393
  %v395 = vpop.f32.mrb[0].mxu0
  %v396 = vadd.f32 %v98, %v395
  %v397 = vpop.f32.mrb[0].mxu0
  %v398 = vadd.f32 %v94, %v397
  %v399 = vpop.f32.mrb[0].mxu0
  %v400 = vadd.f32 %v98, %v399
  %401 = vmatprep.mubr.bf16.mxu0 0
  %402 = vmatmul.mubr.bf16.gmra.mrb[0].mxu0 %v148
  %v403 = vpop.f32.mrb[0].mxu0
  %v404 = vadd.f32 %v94, %v403
  %v405 = vpop.f32.mrb[0].mxu0
  %v406 = vadd.f32 %v98, %v405
  %v407 = vpop.f32.mrb[0].mxu0
  %v408 = vadd.f32 %v94, %v407
  %v409 = vpop.f32.mrb[0].mxu0
  %v410 = vadd.f32 %v98, %v409
  %411 = vmatprep.mubr.bf16.mxu0 0
  %412 = vmatmul.mubr.bf16.gmra.mrb[0].mxu0 %v149
  %v413 = vpop.f32.mrb[0].mxu0
  %v414 = vadd.f32 %v94, %v413
  %v415 = vpop.f32.mrb[0].mxu0
  %v416 = vadd.f32 %v98, %v415
  %v417 = vpop.f32.mrb[0].mxu0
  %v418 = vadd.f32 %v94, %v417
  %v419 = vpop.f32.mrb[0].mxu0
  %v420 = vadd.f32 %v98, %v419
  %421 = vmatprep.mubr.bf16.mxu0 0
  %422 = vmatmul.mubr.bf16.gmra.mrb[0].mxu0 %v150
  %v423 = vpop.f32.mrb[0].mxu0
  %v424 = vadd.f32 %v94, %v423
  %v425 = vpop.f32.mrb[0].mxu0
  %v426 = vadd.f32 %v98, %v425
  %v427 = vpop.f32.mrb[0].mxu0
  %v428 = vadd.f32 %v94, %v427
  %v429 = vpop.f32.mrb[0].mxu0
  %v430 = vadd.f32 %v98, %v429
  %431 = vdwg.mxu0
  %432 = vmatprep.subr.bf16.mxu0 %v258
  %433 = vmatpush1.bf16.msra.mxu0 %v257
  %434 = vmatprep.subr.bf16.mxu0 %v262
  %435 = vmatpush1.bf16.msra.mxu0 %v261
  %436 = vmatprep.subr.bf16.mxu0 %v266
  %437 = vmatpush1.bf16.msra.mxu0 %v265
  %438 = vmatprep.subr.bf16.mxu0 %v270
  %439 = vmatpush1.bf16.msra.mxu0 %v269
  %440 = vmatprep.subr.bf16.mxu0 %v274
  %441 = vmatpush1.bf16.msra.mxu0 %v273
  %442 = vmatprep.subr.bf16.mxu0 %v278
  %443 = vmatpush1.bf16.msra.mxu0 %v277
  %444 = vmatprep.subr.bf16.mxu0 %v282
  %445 = vmatpush1.bf16.msra.mxu0 %v281
  %446 = vmatprep.subr.bf16.mxu0 %v286
  %447 = vmatpush1.bf16.msra.mxu0 %v285
  %448 = vmatprep.subr.bf16.mxu0 0
  %449 = vmatpush1.bf16.msra.mxu0 0
  %450 = vmatprep.subr.bf16.mxu0 0
  %451 = vmatpush1.bf16.msra.mxu0 0
  %452 = vmatprep.subr.bf16.mxu0 0
  %453 = vmatpush1.bf16.msra.mxu0 0
  %454 = vmatprep.subr.bf16.mxu0 0
  %455 = vmatpush1.bf16.msra.mxu0 0
  %456 = vmatprep.subr.bf16.mxu0 0
  %457 = vmatpush1.bf16.msra.mxu0 0
  %458 = vmatprep.subr.bf16.mxu0 0
  %459 = vmatpush1.bf16.msra.mxu0 0
  %460 = vmatprep.subr.bf16.mxu0 0
  %461 = vmatpush1.bf16.msra.mxu0 0
  %462 = vmatprep.subr.bf16.mxu0 0
  %463 = vmatpush1.bf16.msra.mxu0 0
  %464 = vmatprep.mubr.bf16.mxu0 0
  %465 = vmatmul.mubr.bf16.gmra.mrb[0].mxu0 %v143
  %v466 = vpop.f32.mrb[0].mxu0
  %v467 = vadd.f32 %v102, %v466
  %v468 = vpop.f32.mrb[0].mxu0
  %v469 = vadd.f32 %v106, %v468
  %v470 = vpop.f32.mrb[0].mxu0
  %v471 = vadd.f32 %v102, %v470
  %v472 = vpop.f32.mrb[0].mxu0
  %v473 = vadd.f32 %v106, %v472
  %474 = vmatprep.mubr.bf16.mxu0 0
  %475 = vmatmul.mubr.bf16.gmra.mrb[0].mxu0 %v144
  %v476 = vpop.f32.mrb[0].mxu0
  %v477 = vadd.f32 %v102, %v476
  %v478 = vpop.f32.mrb[0].mxu0
  %v479 = vadd.f32 %v106, %v478
  %v480 = vpop.f32.mrb[0].mxu0
  %v481 = vadd.f32 %v102, %v480
  %v482 = vpop.f32.mrb[0].mxu0
  %v483 = vadd.f32 %v106, %v482
  %484 = vmatprep.mubr.bf16.mxu0 0
  %485 = vmatmul.mubr.bf16.gmra.mrb[0].mxu0 %v145
  %v486 = vpop.f32.mrb[0].mxu0
  %v487 = vadd.f32 %v102, %v486
  %v488 = vpop.f32.mrb[0].mxu0
  %v489 = vadd.f32 %v106, %v488
  %v490 = vpop.f32.mrb[0].mxu0
  %v491 = vadd.f32 %v102, %v490
  %v492 = vpop.f32.mrb[0].mxu0
  %v493 = vadd.f32 %v106, %v492
  %494 = vmatprep.mubr.bf16.mxu0 0
  %495 = vmatmul.mubr.bf16.gmra.mrb[0].mxu0 %v146
  %v496 = vpop.f32.mrb[0].mxu0
  %v497 = vadd.f32 %v102, %v496
  %v498 = vpop.f32.mrb[0].mxu0
  %v499 = vadd.f32 %v106, %v498
  %v500 = vpop.f32.mrb[0].mxu0
  %v501 = vadd.f32 %v102, %v500
  %v502 = vpop.f32.mrb[0].mxu0
  %v503 = vadd.f32 %v106, %v502
  %504 = vmatprep.mubr.bf16.mxu0 0
  %505 = vmatmul.mubr.bf16.gmra.mrb[0].mxu0 %v147
  %v506 = vpop.f32.mrb[0].mxu0
  %v507 = vadd.f32 %v102, %v506
  %v508 = vpop.f32.mrb[0].mxu0
  %v509 = vadd.f32 %v106, %v508
  %v510 = vpop.f32.mrb[0].mxu0
  %v511 = vadd.f32 %v102, %v510
  %v512 = vpop.f32.mrb[0].mxu0
  %v513 = vadd.f32 %v106, %v512
  %514 = vmatprep.mubr.bf16.mxu0 0
  %515 = vmatmul.mubr.bf16.gmra.mrb[0].mxu0 %v148
  %v516 = vpop.f32.mrb[0].mxu0
  %v517 = vadd.f32 %v102, %v516
  %v518 = vpop.f32.mrb[0].mxu0
  %v519 = vadd.f32 %v106, %v518
  %v520 = vpop.f32.mrb[0].mxu0
  %v521 = vadd.f32 %v102, %v520
  %v522 = vpop.f32.mrb[0].mxu0
  %v523 = vadd.f32 %v106, %v522
  %524 = vmatprep.mubr.bf16.mxu0 0
  %525 = vmatmul.mubr.bf16.gmra.mrb[0].mxu0 %v149
  %v526 = vpop.f32.mrb[0].mxu0
  %v527 = vadd.f32 %v102, %v526
  %v528 = vpop.f32.mrb[0].mxu0
  %v529 = vadd.f32 %v106, %v528
  %v530 = vpop.f32.mrb[0].mxu0
  %v531 = vadd.f32 %v102, %v530
  %v532 = vpop.f32.mrb[0].mxu0
  %v533 = vadd.f32 %v106, %v532
  %534 = vmatprep.mubr.bf16.mxu0 0
  %535 = vmatmul.mubr.bf16.gmra.mrb[0].mxu0 %v150
  %v536 = vpop.f32.mrb[0].mxu0
  %v537 = vadd.f32 %v102, %v536
  %v538 = vpop.f32.mrb[0].mxu0
  %v539 = vadd.f32 %v106, %v538
  %v540 = vpop.f32.mrb[0].mxu0
  %v541 = vadd.f32 %v102, %v540
  %v542 = vpop.f32.mrb[0].mxu0
  %v543 = vadd.f32 %v106, %v542
  %544 = vdwg.mxu0
  %v545 = vmul.f32 %v354, 0.5
  %v546 = vmul.f32 %v356, 0.5
  %v547 = vmul.f32 %v467, 0.5
  %v548 = vmul.f32 %v469, 0.5
  %v549 = vmul.f32 %v358, 0.5
  %v550 = vmul.f32 %v360, 0.5
  %v551 = vmul.f32 %v471, 0.5
  %v552 = vmul.f32 %v473, 0.5
  %v553 = vmul.f32 %v364, 0.5
  %v554 = vmul.f32 %v366, 0.5
  %v555 = vmul.f32 %v477, 0.5
  %v556 = vmul.f32 %v479, 0.5
  %v557 = vmul.f32 %v368, 0.5
  %v558 = vmul.f32 %v370, 0.5
  %v559 = vmul.f32 %v481, 0.5
  %v560 = vmul.f32 %v483, 0.5
  %v561 = vmul.f32 %v374, 0.5
  %v562 = vmul.f32 %v376, 0.5
  %v563 = vmul.f32 %v487, 0.5
  %v564 = vmul.f32 %v489, 0.5
  %v565 = vmul.f32 %v378, 0.5
  %v566 = vmul.f32 %v380, 0.5
  %v567 = vmul.f32 %v491, 0.5
  %v568 = vmul.f32 %v493, 0.5
  %v569 = vmul.f32 %v384, 0.5
  %v570 = vmul.f32 %v386, 0.5
  %v571 = vmul.f32 %v497, 0.5
  %v572 = vmul.f32 %v499, 0.5
  %v573 = vmul.f32 %v388, 0.5
  %v574 = vmul.f32 %v390, 0.5
  %v575 = vmul.f32 %v501, 0.5
  %v576 = vmul.f32 %v503, 0.5
  %v577 = vmul.f32 %v394, 0.5
  %v578 = vmul.f32 %v396, 0.5
  %v579 = vmul.f32 %v507, 0.5
  %v580 = vmul.f32 %v509, 0.5
  %v581 = vmul.f32 %v398, 0.5
  %v582 = vmul.f32 %v400, 0.5
  %v583 = vmul.f32 %v511, 0.5
  %v584 = vmul.f32 %v513, 0.5
  %v585 = vmul.f32 %v404, 0.5
  %v586 = vmul.f32 %v406, 0.5
  %v587 = vmul.f32 %v517, 0.5
  %v588 = vmul.f32 %v519, 0.5
  %v589 = vmul.f32 %v408, 0.5
  %v590 = vmul.f32 %v410, 0.5
  %v591 = vmul.f32 %v521, 0.5
  %v592 = vmul.f32 %v523, 0.5
  %v593 = vmul.f32 %v414, 0.5
  %v594 = vmul.f32 %v416, 0.5
  %v595 = vmul.f32 %v527, 0.5
  %v596 = vmul.f32 %v529, 0.5
  %v597 = vmul.f32 %v418, 0.5
  %v598 = vmul.f32 %v420, 0.5
  %v599 = vmul.f32 %v531, 0.5
  %v600 = vmul.f32 %v533, 0.5
  %v601 = vmul.f32 %v424, 0.5
  %v602 = vmul.f32 %v426, 0.5
  %v603 = vmul.f32 %v537, 0.5
  %v604 = vmul.f32 %v539, 0.5
  %v605 = vmul.f32 %v428, 0.5
  %v606 = vmul.f32 %v430, 0.5
  %v607 = vmul.f32 %v541, 0.5
  %v608 = vmul.f32 %v543, 0.5
  %v609 = vmul.f32 %v354, %v354
  %v610 = vmul.f32 %v356, %v356
  %v611 = vmul.f32 %v467, %v467
  %v612 = vmul.f32 %v469, %v469
  %v613 = vmul.f32 %v358, %v358
  %v614 = vmul.f32 %v360, %v360
  %v615 = vmul.f32 %v471, %v471
  %v616 = vmul.f32 %v473, %v473
  %v617 = vmul.f32 %v364, %v364
  %v618 = vmul.f32 %v366, %v366
  %v619 = vmul.f32 %v477, %v477
  %v620 = vmul.f32 %v479, %v479
  %v621 = vmul.f32 %v368, %v368
  %v622 = vmul.f32 %v370, %v370
  %v623 = vmul.f32 %v481, %v481
  %v624 = vmul.f32 %v483, %v483
  %v625 = vmul.f32 %v374, %v374
  %v626 = vmul.f32 %v376, %v376
  %v627 = vmul.f32 %v487, %v487
  %v628 = vmul.f32 %v489, %v489
  %v629 = vmul.f32 %v378, %v378
  %v630 = vmul.f32 %v380, %v380
  %v631 = vmul.f32 %v491, %v491
  %v632 = vmul.f32 %v493, %v493
  %v633 = vmul.f32 %v384, %v384
  %v634 = vmul.f32 %v386, %v386
  %v635 = vmul.f32 %v497, %v497
  %v636 = vmul.f32 %v499, %v499
  %v637 = vmul.f32 %v388, %v388
  %v638 = vmul.f32 %v390, %v390
  %v639 = vmul.f32 %v501, %v501
  %v640 = vmul.f32 %v503, %v503
  %v641 = vmul.f32 %v394, %v394
  %v642 = vmul.f32 %v396, %v396
  %v643 = vmul.f32 %v507, %v507
  %v644 = vmul.f32 %v509, %v509
  %v645 = vmul.f32 %v398, %v398
  %v646 = vmul.f32 %v400, %v400
  %v647 = vmul.f32 %v511, %v511
  %v648 = vmul.f32 %v513, %v513
  %v649 = vmul.f32 %v404, %v404
  %v650 = vmul.f32 %v406, %v406
  %v651 = vmul.f32 %v517, %v517
  %v652 = vmul.f32 %v519, %v519
  %v653 = vmul.f32 %v408, %v408
  %v654 = vmul.f32 %v410, %v410
  %v655 = vmul.f32 %v521, %v521
  %v656 = vmul.f32 %v523, %v523
  %v657 = vmul.f32 %v414, %v414
  %v658 = vmul.f32 %v416, %v416
  %v659 = vmul.f32 %v527, %v527
  %v660 = vmul.f32 %v529, %v529
  %v661 = vmul.f32 %v418, %v418
  %v662 = vmul.f32 %v420, %v420
  %v663 = vmul.f32 %v531, %v531
  %v664 = vmul.f32 %v533, %v533
  %v665 = vmul.f32 %v424, %v424
  %v666 = vmul.f32 %v426, %v426
  %v667 = vmul.f32 %v537, %v537
  %v668 = vmul.f32 %v539, %v539
  %v669 = vmul.f32 %v428, %v428
  %v670 = vmul.f32 %v430, %v430
  %v671 = vmul.f32 %v541, %v541
  %v672 = vmul.f32 %v543, %v543
  %v673 = vmul.f32 %v609, %v354
  %v674 = vmul.f32 %v610, %v356
  %v675 = vmul.f32 %v611, %v467
  %v676 = vmul.f32 %v612, %v469
  %v677 = vmul.f32 %v613, %v358
  %v678 = vmul.f32 %v614, %v360
  %v679 = vmul.f32 %v615, %v471
  %v680 = vmul.f32 %v616, %v473
  %v681 = vmul.f32 %v617, %v364
  %v682 = vmul.f32 %v618, %v366
  %v683 = vmul.f32 %v619, %v477
  %v684 = vmul.f32 %v620, %v479
  %v685 = vmul.f32 %v621, %v368
  %v686 = vmul.f32 %v622, %v370
  %v687 = vmul.f32 %v623, %v481
  %v688 = vmul.f32 %v624, %v483
  %v689 = vmul.f32 %v625, %v374
  %v690 = vmul.f32 %v626, %v376
  %v691 = vmul.f32 %v627, %v487
  %v692 = vmul.f32 %v628, %v489
  %v693 = vmul.f32 %v629, %v378
  %v694 = vmul.f32 %v630, %v380
  %v695 = vmul.f32 %v631, %v491
  %v696 = vmul.f32 %v632, %v493
  %v697 = vmul.f32 %v633, %v384
  %v698 = vmul.f32 %v634, %v386
  %v699 = vmul.f32 %v635, %v497
  %v700 = vmul.f32 %v636, %v499
  %v701 = vmul.f32 %v637, %v388
  %v702 = vmul.f32 %v638, %v390
  %v703 = vmul.f32 %v639, %v501
  %v704 = vmul.f32 %v640, %v503
  %v705 = vmul.f32 %v641, %v394
  %v706 = vmul.f32 %v642, %v396
  %v707 = vmul.f32 %v643, %v507
  %v708 = vmul.f32 %v644, %v509
  %v709 = vmul.f32 %v645, %v398
  %v710 = vmul.f32 %v646, %v400
  %v711 = vmul.f32 %v647, %v511
  %v712 = vmul.f32 %v648, %v513
  %v713 = vmul.f32 %v649, %v404
  %v714 = vmul.f32 %v650, %v406
  %v715 = vmul.f32 %v651, %v517
  %v716 = vmul.f32 %v652, %v519
  %v717 = vmul.f32 %v653, %v408
  %v718 = vmul.f32 %v654, %v410
  %v719 = vmul.f32 %v655, %v521
  %v720 = vmul.f32 %v656, %v523
  %v721 = vmul.f32 %v657, %v414
  %v722 = vmul.f32 %v658, %v416
  %v723 = vmul.f32 %v659, %v527
  %v724 = vmul.f32 %v660, %v529
  %v725 = vmul.f32 %v661, %v418
  %v726 = vmul.f32 %v662, %v420
  %v727 = vmul.f32 %v663, %v531
  %v728 = vmul.f32 %v664, %v533
  %v729 = vmul.f32 %v665, %v424
  %v730 = vmul.f32 %v666, %v426
  %v731 = vmul.f32 %v667, %v537
  %v732 = vmul.f32 %v668, %v539
  %v733 = vmul.f32 %v669, %v428
  %v734 = vmul.f32 %v670, %v430
  %v735 = vmul.f32 %v671, %v541
  %v736 = vmul.f32 %v672, %v543
  %v737 = vmul.f32 %v673, 0.044715
  %v738 = vmul.f32 %v674, 0.044715
  %v739 = vmul.f32 %v675, 0.044715
  %v740 = vmul.f32 %v676, 0.044715
  %v741 = vmul.f32 %v677, 0.044715
  %v742 = vmul.f32 %v678, 0.044715
  %v743 = vmul.f32 %v679, 0.044715
  %v744 = vmul.f32 %v680, 0.044715
  %v745 = vmul.f32 %v681, 0.044715
  %v746 = vmul.f32 %v682, 0.044715
  %v747 = vmul.f32 %v683, 0.044715
  %v748 = vmul.f32 %v684, 0.044715
  %v749 = vmul.f32 %v685, 0.044715
  %v750 = vmul.f32 %v686, 0.044715
  %v751 = vmul.f32 %v687, 0.044715
  %v752 = vmul.f32 %v688, 0.044715
  %v753 = vmul.f32 %v689, 0.044715
  %v754 = vmul.f32 %v690, 0.044715
  %v755 = vmul.f32 %v691, 0.044715
  %v756 = vmul.f32 %v692, 0.044715
  %v757 = vmul.f32 %v693, 0.044715
  %v758 = vmul.f32 %v694, 0.044715
  %v759 = vmul.f32 %v695, 0.044715
  %v760 = vmul.f32 %v696, 0.044715
  %v761 = vmul.f32 %v697, 0.044715
  %v762 = vmul.f32 %v698, 0.044715
  %v763 = vmul.f32 %v699, 0.044715
  %v764 = vmul.f32 %v700, 0.044715
  %v765 = vmul.f32 %v701, 0.044715
  %v766 = vmul.f32 %v702, 0.044715
  %v767 = vmul.f32 %v703, 0.044715
  %v768 = vmul.f32 %v704, 0.044715
  %v769 = vmul.f32 %v705, 0.044715
  %v770 = vmul.f32 %v706, 0.044715
  %v771 = vmul.f32 %v707, 0.044715
  %v772 = vmul.f32 %v708, 0.044715
  %v773 = vmul.f32 %v709, 0.044715
  %v774 = vmul.f32 %v710, 0.044715
  %v775 = vmul.f32 %v711, 0.044715
  %v776 = vmul.f32 %v712, 0.044715
  %v777 = vmul.f32 %v713, 0.044715
  %v778 = vmul.f32 %v714, 0.044715
  %v779 = vmul.f32 %v715, 0.044715
  %v780 = vmul.f32 %v716, 0.044715
  %v781 = vmul.f32 %v717, 0.044715
  %v782 = vmul.f32 %v718, 0.044715
  %v783 = vmul.f32 %v719, 0.044715
  %v784 = vmul.f32 %v720, 0.044715
  %v785 = vmul.f32 %v721, 0.044715
  %v786 = vmul.f32 %v722, 0.044715
  %v787 = vmul.f32 %v723, 0.044715
  %v788 = vmul.f32 %v724, 0.044715
  %v789 = vmul.f32 %v725, 0.044715
  %v790 = vmul.f32 %v726, 0.044715
  %v791 = vmul.f32 %v727, 0.044715
  %v792 = vmul.f32 %v728, 0.044715
  %v793 = vmul.f32 %v729, 0.044715
  %v794 = vmul.f32 %v730, 0.044715
  %v795 = vmul.f32 %v731, 0.044715
  %v796 = vmul.f32 %v732, 0.044715
  %v797 = vmul.f32 %v733, 0.044715
  %v798 = vmul.f32 %v734, 0.044715
  %v799 = vmul.f32 %v735, 0.044715
  %v800 = vmul.f32 %v736, 0.044715
  %v801 = vadd.f32 %v354, %v737
  %v802 = vadd.f32 %v356, %v738
  %v803 = vadd.f32 %v467, %v739
  %v804 = vadd.f32 %v469, %v740
  %v805 = vadd.f32 %v358, %v741
  %v806 = vadd.f32 %v360, %v742
  %v807 = vadd.f32 %v471, %v743
  %v808 = vadd.f32 %v473, %v744
  %v809 = vadd.f32 %v364, %v745
  %v810 = vadd.f32 %v366, %v746
  %v811 = vadd.f32 %v477, %v747
  %v812 = vadd.f32 %v479, %v748
  %v813 = vadd.f32 %v368, %v749
  %v814 = vadd.f32 %v370, %v750
  %v815 = vadd.f32 %v481, %v751
  %v816 = vadd.f32 %v483, %v752
  %v817 = vadd.f32 %v374, %v753
  %v818 = vadd.f32 %v376, %v754
  %v819 = vadd.f32 %v487, %v755
  %v820 = vadd.f32 %v489, %v756
  %v821 = vadd.f32 %v378, %v757
  %v822 = vadd.f32 %v380, %v758
  %v823 = vadd.f32 %v491, %v759
  %v824 = vadd.f32 %v493, %v760
  %v825 = vadd.f32 %v384, %v761
  %v826 = vadd.f32 %v386, %v762
  %v827 = vadd.f32 %v497, %v763
  %v828 = vadd.f32 %v499, %v764
  %v829 = vadd.f32 %v388, %v765
  %v830 = vadd.f32 %v390, %v766
  %v831 = vadd.f32 %v501, %v767
  %v832 = vadd.f32 %v503, %v768
  %v833 = vadd.f32 %v394, %v769
  %v834 = vadd.f32 %v396, %v770
  %v835 = vadd.f32 %v507, %v771
  %v836 = vadd.f32 %v509, %v772
  %v837 = vadd.f32 %v398, %v773
  %v838 = vadd.f32 %v400, %v774
  %v839 = vadd.f32 %v511, %v775
  %v840 = vadd.f32 %v513, %v776
  %v841 = vadd.f32 %v404, %v777
  %v842 = vadd.f32 %v406, %v778
  %v843 = vadd.f32 %v517, %v779
  %v844 = vadd.f32 %v519, %v780
  %v845 = vadd.f32 %v408, %v781
  %v846 = vadd.f32 %v410, %v782
  %v847 = vadd.f32 %v521, %v783
  %v848 = vadd.f32 %v523, %v784
  %v849 = vadd.f32 %v414, %v785
  %v850 = vadd.f32 %v416, %v786
  %v851 = vadd.f32 %v527, %v787
  %v852 = vadd.f32 %v529, %v788
  %v853 = vadd.f32 %v418, %v789
  %v854 = vadd.f32 %v420, %v790
  %v855 = vadd.f32 %v531, %v791
  %v856 = vadd.f32 %v533, %v792
  %v857 = vadd.f32 %v424, %v793
  %v858 = vadd.f32 %v426, %v794
  %v859 = vadd.f32 %v537, %v795
  %v860 = vadd.f32 %v539, %v796
  %v861 = vadd.f32 %v428, %v797
  %v862 = vadd.f32 %v430, %v798
  %v863 = vadd.f32 %v541, %v799
  %v864 = vadd.f32 %v543, %v800
  %v865 = vmul.f32 %v801, 0.7978846
  %v866 = vmul.f32 %v802, 0.7978846
  %v867 = vmul.f32 %v803, 0.7978846
  %v868 = vmul.f32 %v804, 0.7978846
  %v869 = vmul.f32 %v805, 0.7978846
  %v870 = vmul.f32 %v806, 0.7978846
  %v871 = vmul.f32 %v807, 0.7978846
  %v872 = vmul.f32 %v808, 0.7978846
  %v873 = vmul.f32 %v809, 0.7978846
  %v874 = vmul.f32 %v810, 0.7978846
  %v875 = vmul.f32 %v811, 0.7978846
  %v876 = vmul.f32 %v812, 0.7978846
  %v877 = vmul.f32 %v813, 0.7978846
  %v878 = vmul.f32 %v814, 0.7978846
  %v879 = vmul.f32 %v815, 0.7978846
  %v880 = vmul.f32 %v816, 0.7978846
  %v881 = vmul.f32 %v817, 0.7978846
  %v882 = vmul.f32 %v818, 0.7978846
  %v883 = vmul.f32 %v819, 0.7978846
  %v884 = vmul.f32 %v820, 0.7978846
  %v885 = vmul.f32 %v821, 0.7978846
  %v886 = vmul.f32 %v822, 0.7978846
  %v887 = vmul.f32 %v823, 0.7978846
  %v888 = vmul.f32 %v824, 0.7978846
  %v889 = vmul.f32 %v825, 0.7978846
  %v890 = vmul.f32 %v826, 0.7978846
  %v891 = vmul.f32 %v827, 0.7978846
  %v892 = vmul.f32 %v828, 0.7978846
  %v893 = vmul.f32 %v829, 0.7978846
  %v894 = vmul.f32 %v830, 0.7978846
  %v895 = vmul.f32 %v831, 0.7978846
  %v896 = vmul.f32 %v832, 0.7978846
  %v897 = vmul.f32 %v833, 0.7978846
  %v898 = vmul.f32 %v834, 0.7978846
  %v899 = vmul.f32 %v835, 0.7978846
  %v900 = vmul.f32 %v836, 0.7978846
  %v901 = vmul.f32 %v837, 0.7978846
  %v902 = vmul.f32 %v838, 0.7978846
  %v903 = vmul.f32 %v839, 0.7978846
  %v904 = vmul.f32 %v840, 0.7978846
  %v905 = vmul.f32 %v841, 0.7978846
  %v906 = vmul.f32 %v842, 0.7978846
  %v907 = vmul.f32 %v843, 0.7978846
  %v908 = vmul.f32 %v844, 0.7978846
  %v909 = vmul.f32 %v845, 0.7978846
  %v910 = vmul.f32 %v846, 0.7978846
  %v911 = vmul.f32 %v847, 0.7978846
  %v912 = vmul.f32 %v848, 0.7978846
  %v913 = vmul.f32 %v849, 0.7978846
  %v914 = vmul.f32 %v850, 0.7978846
  %v915 = vmul.f32 %v851, 0.7978846
  %v916 = vmul.f32 %v852, 0.7978846
  %v917 = vmul.f32 %v853, 0.7978846
  %v918 = vmul.f32 %v854, 0.7978846
  %v919 = vmul.f32 %v855, 0.7978846
  %v920 = vmul.f32 %v856, 0.7978846
  %v921 = vmul.f32 %v857, 0.7978846
  %v922 = vmul.f32 %v858, 0.7978846
  %v923 = vmul.f32 %v859, 0.7978846
  %v924 = vmul.f32 %v860, 0.7978846
  %v925 = vmul.f32 %v861, 0.7978846
  %v926 = vmul.f32 %v862, 0.7978846
  %v927 = vmul.f32 %v863, 0.7978846
  %v928 = vmul.f32 %v864, 0.7978846
  %v929 = vtanh.pop %v865
  %v930 = vtanh.pop %v866
  %v931 = vtanh.pop %v867
  %v932 = vtanh.pop %v868
  %v933 = vtanh.pop %v869
  %v934 = vtanh.pop %v870
  %v935 = vtanh.pop %v871
  %v936 = vtanh.pop %v872
  %v937 = vtanh.pop %v873
  %v938 = vtanh.pop %v874
  %v939 = vtanh.pop %v875
  %v940 = vtanh.pop %v876
  %v941 = vtanh.pop %v877
  %v942 = vtanh.pop %v878
  %v943 = vtanh.pop %v879
  %v944 = vtanh.pop %v880
  %v945 = vtanh.pop %v881
  %v946 = vtanh.pop %v882
  %v947 = vtanh.pop %v883
  %v948 = vtanh.pop %v884
  %v949 = vtanh.pop %v885
  %v950 = vtanh.pop %v886
  %v951 = vtanh.pop %v887
  %v952 = vtanh.pop %v888
  %v953 = vtanh.pop %v889
  %v954 = vtanh.pop %v890
  %v955 = vtanh.pop %v891
  %v956 = vtanh.pop %v892
  %v957 = vtanh.pop %v893
  %v958 = vtanh.pop %v894
  %v959 = vtanh.pop %v895
  %v960 = vtanh.pop %v896
  %v961 = vtanh.pop %v897
  %v962 = vtanh.pop %v898
  %v963 = vtanh.pop %v899
  %v964 = vtanh.pop %v900
  %v965 = vtanh.pop %v901
  %v966 = vtanh.pop %v902
  %v967 = vtanh.pop %v903
  %v968 = vtanh.pop %v904
  %v969 = vtanh.pop %v905
  %v970 = vtanh.pop %v906
  %v971 = vtanh.pop %v907
  %v972 = vtanh.pop %v908
  %v973 = vtanh.pop %v909
  %v974 = vtanh.pop %v910
  %v975 = vtanh.pop %v911
  %v976 = vtanh.pop %v912
  %v977 = vtanh.pop %v913
  %v978 = vtanh.pop %v914
  %v979 = vtanh.pop %v915
  %v980 = vtanh.pop %v916
  %v981 = vtanh.pop %v917
  %v982 = vtanh.pop %v918
  %v983 = vtanh.pop %v919
  %v984 = vtanh.pop %v920
  %v985 = vtanh.pop %v921
  %v986 = vtanh.pop %v922
  %v987 = vtanh.pop %v923
  %v988 = vtanh.pop %v924
  %v989 = vtanh.pop %v925
  %v990 = vtanh.pop %v926
  %v991 = vtanh.pop %v927
  %v992 = vtanh.pop %v928
  %v993 = vadd.f32 %v929, 1.0
  %v994 = vadd.f32 %v930, 1.0
  %v995 = vadd.f32 %v931, 1.0
  %v996 = vadd.f32 %v932, 1.0
  %v997 = vadd.f32 %v933, 1.0
  %v998 = vadd.f32 %v934, 1.0
  %v999 = vadd.f32 %v935, 1.0
  %v1000 = vadd.f32 %v936, 1.0
  %v1001 = vadd.f32 %v937, 1.0
  %v1002 = vadd.f32 %v938, 1.0
  %v1003 = vadd.f32 %v939, 1.0
  %v1004 = vadd.f32 %v940, 1.0
  %v1005 = vadd.f32 %v941, 1.0
  %v1006 = vadd.f32 %v942, 1.0
  %v1007 = vadd.f32 %v943, 1.0
  %v1008 = vadd.f32 %v944, 1.0
  %v1009 = vadd.f32 %v945, 1.0
  %v1010 = vadd.f32 %v946, 1.0
  %v1011 = vadd.f32 %v947, 1.0
  %v1012 = vadd.f32 %v948, 1.0
  %v1013 = vadd.f32 %v949, 1.0
  %v1014 = vadd.f32 %v950, 1.0
  %v1015 = vadd.f32 %v951, 1.0
  %v1016 = vadd.f32 %v952, 1.0
  %v1017 = vadd.f32 %v953, 1.0
  %v1018 = vadd.f32 %v954, 1.0
  %v1019 = vadd.f32 %v955, 1.0
  %v1020 = vadd.f32 %v956, 1.0
  %v1021 = vadd.f32 %v957, 1.0
  %v1022 = vadd.f32 %v958, 1.0
  %v1023 = vadd.f32 %v959, 1.0
  %v1024 = vadd.f32 %v960, 1.0
  %v1025 = vadd.f32 %v961, 1.0
  %v1026 = vadd.f32 %v962, 1.0
  %v1027 = vadd.f32 %v963, 1.0
  %v1028 = vadd.f32 %v964, 1.0
  %v1029 = vadd.f32 %v965, 1.0
  %v1030 = vadd.f32 %v966, 1.0
  %v1031 = vadd.f32 %v967, 1.0
  %v1032 = vadd.f32 %v968, 1.0
  %v1033 = vadd.f32 %v969, 1.0
  %v1034 = vadd.f32 %v970, 1.0
  %v1035 = vadd.f32 %v971, 1.0
  %v1036 = vadd.f32 %v972, 1.0
  %v1037 = vadd.f32 %v973, 1.0
  %v1038 = vadd.f32 %v974, 1.0
  %v1039 = vadd.f32 %v975, 1.0
  %v1040 = vadd.f32 %v976, 1.0
  %v1041 = vadd.f32 %v977, 1.0
  %v1042 = vadd.f32 %v978, 1.0
  %v1043 = vadd.f32 %v979, 1.0
  %v1044 = vadd.f32 %v980, 1.0
  %v1045 = vadd.f32 %v981, 1.0
  %v1046 = vadd.f32 %v982, 1.0
  %v1047 = vadd.f32 %v983, 1.0
  %v1048 = vadd.f32 %v984, 1.0
  %v1049 = vadd.f32 %v985, 1.0
  %v1050 = vadd.f32 %v986, 1.0
  %v1051 = vadd.f32 %v987, 1.0
  %v1052 = vadd.f32 %v988, 1.0
  %v1053 = vadd.f32 %v989, 1.0
  %v1054 = vadd.f32 %v990, 1.0
  %v1055 = vadd.f32 %v991, 1.0
  %v1056 = vadd.f32 %v992, 1.0
  %v1057 = vmul.f32 %v545, %v993
  %v1058 = vmul.f32 %v546, %v994
  %v1059 = vmul.f32 %v547, %v995
  %v1060 = vmul.f32 %v548, %v996
  %v1061 = vmul.f32 %v549, %v997
  %v1062 = vmul.f32 %v550, %v998
  %v1063 = vmul.f32 %v551, %v999
  %v1064 = vmul.f32 %v552, %v1000
  %v1065 = vmul.f32 %v553, %v1001
  %v1066 = vmul.f32 %v554, %v1002
  %v1067 = vmul.f32 %v555, %v1003
  %v1068 = vmul.f32 %v556, %v1004
  %v1069 = vmul.f32 %v557, %v1005
  %v1070 = vmul.f32 %v558, %v1006
  %v1071 = vmul.f32 %v559, %v1007
  %v1072 = vmul.f32 %v560, %v1008
  %v1073 = vmul.f32 %v561, %v1009
  %v1074 = vmul.f32 %v562, %v1010
  %v1075 = vmul.f32 %v563, %v1011
  %v1076 = vmul.f32 %v564, %v1012
  %v1077 = vmul.f32 %v565, %v1013
  %v1078 = vmul.f32 %v566, %v1014
  %v1079 = vmul.f32 %v567, %v1015
  %v1080 = vmul.f32 %v568, %v1016
  %v1081 = vmul.f32 %v569, %v1017
  %v1082 = vmul.f32 %v570, %v1018
  %v1083 = vmul.f32 %v571, %v1019
  %v1084 = vmul.f32 %v572, %v1020
  %v1085 = vmul.f32 %v573, %v1021
  %v1086 = vmul.f32 %v574, %v1022
  %v1087 = vmul.f32 %v575, %v1023
  %v1088 = vmul.f32 %v576, %v1024
  %v1089 = vmul.f32 %v577, %v1025
  %v1090 = vmul.f32 %v578, %v1026
  %v1091 = vmul.f32 %v579, %v1027
  %v1092 = vmul.f32 %v580, %v1028
  %v1093 = vmul.f32 %v581, %v1029
  %v1094 = vmul.f32 %v582, %v1030
  %v1095 = vmul.f32 %v583, %v1031
  %v1096 = vmul.f32 %v584, %v1032
  %v1097 = vmul.f32 %v585, %v1033
  %v1098 = vmul.f32 %v586, %v1034
  %v1099 = vmul.f32 %v587, %v1035
  %v1100 = vmul.f32 %v588, %v1036
  %v1101 = vmul.f32 %v589, %v1037
  %v1102 = vmul.f32 %v590, %v1038
  %v1103 = vmul.f32 %v591, %v1039
  %v1104 = vmul.f32 %v592, %v1040
  %v1105 = vmul.f32 %v593, %v1041
  %v1106 = vmul.f32 %v594, %v1042
  %v1107 = vmul.f32 %v595, %v1043
  %v1108 = vmul.f32 %v596, %v1044
  %v1109 = vmul.f32 %v597, %v1045
  %v1110 = vmul.f32 %v598, %v1046
  %v1111 = vmul.f32 %v599, %v1047
  %v1112 = vmul.f32 %v600, %v1048
  %v1113 = vmul.f32 %v601, %v1049
  %v1114 = vmul.f32 %v602, %v1050
  %v1115 = vmul.f32 %v603, %v1051
  %v1116 = vmul.f32 %v604, %v1052
  %v1117 = vmul.f32 %v605, %v1053
  %v1118 = vmul.f32 %v606, %v1054
  %v1119 = vmul.f32 %v607, %v1055
  %v1120 = vmul.f32 %v608, %v1056
  %v1121 = vld [vmem:[#allocation2] sm:$0xff]
  %v1122 = vld [vmem:[#allocation2 + $0x8] sm:$0xff]
  %v1123 = vld [vmem:[#allocation2 + $0x10] sm:$0xff]
  %v1124 = vld [vmem:[#allocation2 + $0x18] sm:$0xff]
  %v1125 = vld [vmem:[#allocation2 + $0x20] sm:$0xff]
  %v1126 = vld [vmem:[#allocation2 + $0x28] sm:$0xff]
  %v1127 = vld [vmem:[#allocation2 + $0x30] sm:$0xff]
  %v1128 = vld [vmem:[#allocation2 + $0x38] sm:$0xff]
  %v1129 = vld [vmem:[#allocation2 + $0x40] sm:$0xff]
  %v1130 = vld [vmem:[#allocation2 + $0x48] sm:$0xff]
  %v1131 = vld [vmem:[#allocation2 + $0x50] sm:$0xff]
  %v1132 = vld [vmem:[#allocation2 + $0x58] sm:$0xff]
  %v1133 = vld [vmem:[#allocation2 + $0x60] sm:$0xff]
  %v1134 = vld [vmem:[#allocation2 + $0x68] sm:$0xff]
  %v1135 = vld [vmem:[#allocation2 + $0x70] sm:$0xff]
  %v1136 = vld [vmem:[#allocation2 + $0x78] sm:$0xff]
  %v1137 = vpack.c.bf16 %v1061, %v1057
  %v1138 = vpack.c.bf16 %v1062, %v1058
  %v1139 = vpack.c.bf16 %v1063, %v1059
  %v1140 = vpack.c.bf16 %v1064, %v1060
  %v1141 = vpack.c.bf16 %v1069, %v1065
  %v1142 = vpack.c.bf16 %v1070, %v1066
  %v1143 = vpack.c.bf16 %v1071, %v1067
  %v1144 = vpack.c.bf16 %v1072, %v1068
  %v1145 = vpack.c.bf16 %v1077, %v1073
  %v1146 = vpack.c.bf16 %v1078, %v1074
  %v1147 = vpack.c.bf16 %v1079, %v1075
  %v1148 = vpack.c.bf16 %v1080, %v1076
  %v1149 = vpack.c.bf16 %v1085, %v1081
  %v1150 = vpack.c.bf16 %v1086, %v1082
  %v1151 = vpack.c.bf16 %v1087, %v1083
  %v1152 = vpack.c.bf16 %v1088, %v1084
  %v1153 = vpack.c.bf16 %v1093, %v1089
  %v1154 = vpack.c.bf16 %v1094, %v1090
  %v1155 = vpack.c.bf16 %v1095, %v1091
  %v1156 = vpack.c.bf16 %v1096, %v1092
  %v1157 = vpack.c.bf16 %v1101, %v1097
  %v1158 = vpack.c.bf16 %v1102, %v1098
  %v1159 = vpack.c.bf16 %v1103, %v1099
  %v1160 = vpack.c.bf16 %v1104, %v1100
  %v1161 = vpack.c.bf16 %v1109, %v1105
  %v1162 = vpack.c.bf16 %v1110, %v1106
  %v1163 = vpack.c.bf16 %v1111, %v1107
  %v1164 = vpack.c.bf16 %v1112, %v1108
  %v1165 = vpack.c.bf16 %v1117, %v1113
  %v1166 = vpack.c.bf16 %v1118, %v1114
  %v1167 = vpack.c.bf16 %v1119, %v1115
  %v1168 = vpack.c.bf16 %v1120, %v1116
  %v1169 = vld [vmem:[%s3] sm:$0xf]
  %v1170 = vld [vmem:[%s3 + $0x4] sm:$0xf]
  %v1171 = vld [vmem:[%s3 + $0x8] sm:$0xf]
  %v1172 = vld [vmem:[%s3 + $0xc] sm:$0xf]
  %v1173 = vld [vmem:[%s3 + $0x10] sm:$0xf]
  %v1174 = vld [vmem:[%s3 + $0x14] sm:$0xf]
  %v1175 = vld [vmem:[%s3 + $0x18] sm:$0xf]
  %v1176 = vld [vmem:[%s3 + $0x1c] sm:$0xf]
  %v1177 = vld [vmem:[%s3 + $0x20] sm:$0xf]
  %v1178 = vld [vmem:[%s3 + $0x24] sm:$0xf]
  %v1179 = vld [vmem:[%s3 + $0x28] sm:$0xf]
  %v1180 = vld [vmem:[%s3 + $0x2c] sm:$0xf]
  %v1181 = vld [vmem:[%s3 + $0x30] sm:$0xf]
  %v1182 = vld [vmem:[%s3 + $0x34] sm:$0xf]
  %v1183 = vld [vmem:[%s3 + $0x38] sm:$0xf]
  %v1184 = vld [vmem:[%s3 + $0x3c] sm:$0xf]
  %v1185 = vld [vmem:[%s3 + $0x40] sm:$0xf]
  %v1186 = vld [vmem:[%s3 + $0x44] sm:$0xf]
  %v1187 = vld [vmem:[%s3 + $0x48] sm:$0xf]
  %v1188 = vld [vmem:[%s3 + $0x4c] sm:$0xf]
  %v1189 = vld [vmem:[%s3 + $0x50] sm:$0xf]
  %v1190 = vld [vmem:[%s3 + $0x54] sm:$0xf]
  %v1191 = vld [vmem:[%s3 + $0x58] sm:$0xf]
  %v1192 = vld [vmem:[%s3 + $0x5c] sm:$0xf]
  %v1193 = vld [vmem:[%s3 + $0x60] sm:$0xf]
  %v1194 = vld [vmem:[%s3 + $0x64] sm:$0xf]
  %v1195 = vld [vmem:[%s3 + $0x68] sm:$0xf]
  %v1196 = vld [vmem:[%s3 + $0x6c] sm:$0xf]
  %v1197 = vld [vmem:[%s3 + $0x70] sm:$0xf]
  %v1198 = vld [vmem:[%s3 + $0x74] sm:$0xf]
  %v1199 = vld [vmem:[%s3 + $0x78] sm:$0xf]
  %v1200 = vld [vmem:[%s3 + $0x7c] sm:$0xf]
  %v1201 = vld [vmem:[%s3 + $0x80] sm:$0xf]
  %v1202 = vld [vmem:[%s3 + $0x84] sm:$0xf]
  %v1203 = vld [vmem:[%s3 + $0x88] sm:$0xf]
  %v1204 = vld [vmem:[%s3 + $0x8c] sm:$0xf]
  %v1205 = vld [vmem:[%s3 + $0x90] sm:$0xf]
  %v1206 = vld [vmem:[%s3 + $0x94] sm:$0xf]
  %v1207 = vld [vmem:[%s3 + $0x98] sm:$0xf]
  %v1208 = vld [vmem:[%s3 + $0x9c] sm:$0xf]
  %v1209 = vld [vmem:[%s3 + $0xa0] sm:$0xf]
  %v1210 = vld [vmem:[%s3 + $0xa4] sm:$0xf]
  %v1211 = vld [vmem:[%s3 + $0xa8] sm:$0xf]
  %v1212 = vld [vmem:[%s3 + $0xac] sm:$0xf]
  %v1213 = vld [vmem:[%s3 + $0xb0] sm:$0xf]
  %v1214 = vld [vmem:[%s3 + $0xb4] sm:$0xf]
  %v1215 = vld [vmem:[%s3 + $0xb8] sm:$0xf]
  %v1216 = vld [vmem:[%s3 + $0xbc] sm:$0xf]
  %v1217 = vld [vmem:[%s3 + $0xc0] sm:$0xf]
  %v1218 = vld [vmem:[%s3 + $0xc4] sm:$0xf]
  %v1219 = vld [vmem:[%s3 + $0xc8] sm:$0xf]
  %v1220 = vld [vmem:[%s3 + $0xcc] sm:$0xf]
  %v1221 = vld [vmem:[%s3 + $0xd0] sm:$0xf]
  %v1222 = vld [vmem:[%s3 + $0xd4] sm:$0xf]
  %v1223 = vld [vmem:[%s3 + $0xd8] sm:$0xf]
  %v1224 = vld [vmem:[%s3 + $0xdc] sm:$0xf]
  %v1225 = vld [vmem:[%s3 + $0xe0] sm:$0xf]
  %v1226 = vld [vmem:[%s3 + $0xe4] sm:$0xf]
  %v1227 = vld [vmem:[%s3 + $0xe8] sm:$0xf]
  %v1228 = vld [vmem:[%s3 + $0xec] sm:$0xf]
  %v1229 = vld [vmem:[%s3 + $0xf0] sm:$0xf]
  %v1230 = vld [vmem:[%s3 + $0xf4] sm:$0xf]
  %v1231 = vld [vmem:[%s3 + $0xf8] sm:$0xf]
  %v1232 = vld [vmem:[%s3 + $0xfc] sm:$0xf]
  %v1297 = vunpack.c.l.b16 %v1169
  %v1298 = vunpack.c.l.b16 %v1170
  %v1299 = vunpack.c.l.b16 %v1171
  %v1300 = vunpack.c.l.b16 %v1172
  %v1301 = vunpack.c.l.b16 %v1173
  %v1302 = vunpack.c.l.b16 %v1174
  %v1303 = vunpack.c.l.b16 %v1175
  %v1304 = vunpack.c.l.b16 %v1176
  %v1305 = vunpack.c.l.b16 %v1177
  %v1306 = vunpack.c.l.b16 %v1178
  %v1307 = vunpack.c.l.b16 %v1179
  %v1308 = vunpack.c.l.b16 %v1180
  %v1309 = vunpack.c.l.b16 %v1181
  %v1310 = vunpack.c.l.b16 %v1182
  %v1311 = vunpack.c.l.b16 %v1183
  %v1312 = vunpack.c.l.b16 %v1184
  %v1313 = vunpack.c.l.b16 %v1185
  %v1314 = vunpack.c.l.b16 %v1186
  %v1315 = vunpack.c.l.b16 %v1187
  %v1316 = vunpack.c.l.b16 %v1188
  %v1317 = vunpack.c.l.b16 %v1189
  %v1318 = vunpack.c.l.b16 %v1190
  %v1319 = vunpack.c.l.b16 %v1191
  %v1320 = vunpack.c.l.b16 %v1192
  %v1321 = vunpack.c.l.b16 %v1193
  %v1322 = vunpack.c.l.b16 %v1194
  %v1323 = vunpack.c.l.b16 %v1195
  %v1324 = vunpack.c.l.b16 %v1196
  %v1325 = vunpack.c.l.b16 %v1197
  %v1326 = vunpack.c.l.b16 %v1198
  %v1327 = vunpack.c.l.b16 %v1199
  %v1328 = vunpack.c.l.b16 %v1200
  %v1329 = vunpack.c.l.b16 %v1201
  %v1330 = vunpack.c.l.b16 %v1202
  %v1331 = vunpack.c.l.b16 %v1203
  %v1332 = vunpack.c.l.b16 %v1204
  %v1333 = vunpack.c.l.b16 %v1205
  %v1334 = vunpack.c.l.b16 %v1206
  %v1335 = vunpack.c.l.b16 %v1207
  %v1336 = vunpack.c.l.b16 %v1208
  %v1337 = vunpack.c.l.b16 %v1209
  %v1338 = vunpack.c.l.b16 %v1210
  %v1339 = vunpack.c.l.b16 %v1211
  %v1340 = vunpack.c.l.b16 %v1212
  %v1341 = vunpack.c.l.b16 %v1213
  %v1342 = vunpack.c.l.b16 %v1214
  %v1343 = vunpack.c.l.b16 %v1215
  %v1344 = vunpack.c.l.b16 %v1216
  %v1345 = vunpack.c.l.b16 %v1217
  %v1346 = vunpack.c.l.b16 %v1218
  %v1347 = vunpack.c.l.b16 %v1219
  %v1348 = vunpack.c.l.b16 %v1220
  %v1349 = vunpack.c.l.b16 %v1221
  %v1350 = vunpack.c.l.b16 %v1222
  %v1351 = vunpack.c.l.b16 %v1223
  %v1352 = vunpack.c.l.b16 %v1224
  %v1353 = vunpack.c.l.b16 %v1225
  %v1354 = vunpack.c.l.b16 %v1226
  %v1355 = vunpack.c.l.b16 %v1227
  %v1356 = vunpack.c.l.b16 %v1228
  %v1357 = vunpack.c.l.b16 %v1229
  %v1358 = vunpack.c.l.b16 %v1230
  %v1359 = vunpack.c.l.b16 %v1231
  %v1360 = vunpack.c.l.b16 %v1232
  %v1361 = vpack.c.b16 %v1298, %v1297
  %v1362 = vpack.c.b16 %v1300, %v1299
  %v1363 = vpack.c.b16 %v1302, %v1301
  %v1364 = vpack.c.b16 %v1304, %v1303
  %v1365 = vpack.c.b16 %v1306, %v1305
  %v1366 = vpack.c.b16 %v1308, %v1307
  %v1367 = vpack.c.b16 %v1310, %v1309
  %v1368 = vpack.c.b16 %v1312, %v1311
  %v1369 = vpack.c.b16 %v1314, %v1313
  %v1370 = vpack.c.b16 %v1316, %v1315
  %v1371 = vpack.c.b16 %v1318, %v1317
  %v1372 = vpack.c.b16 %v1320, %v1319
  %v1373 = vpack.c.b16 %v1322, %v1321
  %v1374 = vpack.c.b16 %v1324, %v1323
  %v1375 = vpack.c.b16 %v1326, %v1325
  %v1376 = vpack.c.b16 %v1328, %v1327
  %v1377 = vpack.c.b16 %v1330, %v1329
  %v1378 = vpack.c.b16 %v1332, %v1331
  %v1379 = vpack.c.b16 %v1334, %v1333
  %v1380 = vpack.c.b16 %v1336, %v1335
  %v1381 = vpack.c.b16 %v1338, %v1337
  %v1382 = vpack.c.b16 %v1340, %v1339
  %v1383 = vpack.c.b16 %v1342, %v1341
  %v1384 = vpack.c.b16 %v1344, %v1343
  %v1385 = vpack.c.b16 %v1346, %v1345
  %v1386 = vpack.c.b16 %v1348, %v1347
  %v1387 = vpack.c.b16 %v1350, %v1349
  %v1388 = vpack.c.b16 %v1352, %v1351
  %v1389 = vpack.c.b16 %v1354, %v1353
  %v1390 = vpack.c.b16 %v1356, %v1355
  %v1391 = vpack.c.b16 %v1358, %v1357
  %v1392 = vpack.c.b16 %v1360, %v1359
  %1425 = vmatprep.subr.bf16.mxu0 0
  %1426 = vmatpush1.bf16.msra.mxu0 %v1361
  %1427 = vmatprep.subr.bf16.mxu0 0
  %1428 = vmatpush1.bf16.msra.mxu0 %v1362
  %1429 = vmatprep.subr.bf16.mxu0 0
  %1430 = vmatpush1.bf16.msra.mxu0 %v1363
  %1431 = vmatprep.subr.bf16.mxu0 0
  %1432 = vmatpush1.bf16.msra.mxu0 %v1364
  %1433 = vmatprep.subr.bf16.mxu0 0
  %1434 = vmatpush1.bf16.msra.mxu0 %v1365
  %1435 = vmatprep.subr.bf16.mxu0 0
  %1436 = vmatpush1.bf16.msra.mxu0 %v1366
  %1437 = vmatprep.subr.bf16.mxu0 0
  %1438 = vmatpush1.bf16.msra.mxu0 %v1367
  %1439 = vmatprep.subr.bf16.mxu0 0
  %1440 = vmatpush1.bf16.msra.mxu0 %v1368
  %1441 = vmatprep.subr.bf16.mxu0 0
  %1442 = vmatpush1.bf16.msra.mxu0 %v1369
  %1443 = vmatprep.subr.bf16.mxu0 0
  %1444 = vmatpush1.bf16.msra.mxu0 %v1370
  %1445 = vmatprep.subr.bf16.mxu0 0
  %1446 = vmatpush1.bf16.msra.mxu0 %v1371
  %1447 = vmatprep.subr.bf16.mxu0 0
  %1448 = vmatpush1.bf16.msra.mxu0 %v1372
  %1449 = vmatprep.subr.bf16.mxu0 0
  %1450 = vmatpush1.bf16.msra.mxu0 %v1373
  %1451 = vmatprep.subr.bf16.mxu0 0
  %1452 = vmatpush1.bf16.msra.mxu0 %v1374
  %1453 = vmatprep.subr.bf16.mxu0 0
  %1454 = vmatpush1.bf16.msra.mxu0 %v1375
  %1455 = vmatprep.subr.bf16.mxu0 0
  %1456 = vmatpush1.bf16.msra.mxu0 %v1376
  %1457 = vmatprep.mubr.bf16.mxu0 %v1138
  %1458 = vmatmul.mubr.bf16.gmra.mrb[0].mxu0 %v1137
  %v1459 = vpop.f32.mrb[0].mxu0
  %v1460 = vadd.f32 0.0, %v1459
  %v1461 = vpop.f32.mrb[0].mxu0
  %v1462 = vpop.f32.mrb[0].mxu0
  %v1463 = vadd.f32 0.0, %v1462
  %v1464 = vpop.f32.mrb[0].mxu0
  %1465 = vmatprep.mubr.bf16.mxu0 %v1142
  %1466 = vmatmul.mubr.bf16.gmra.mrb[0].mxu0 %v1141
  %v1467 = vpop.f32.mrb[0].mxu0
  %v1468 = vadd.f32 0.0, %v1467
  %v1469 = vpop.f32.mrb[0].mxu0
  %v1470 = vpop.f32.mrb[0].mxu0
  %v1471 = vadd.f32 0.0, %v1470
  %v1472 = vpop.f32.mrb[0].mxu0
  %1473 = vmatprep.mubr.bf16.mxu0 %v1146
  %1474 = vmatmul.mubr.bf16.gmra.mrb[0].mxu0 %v1145
  %v1475 = vpop.f32.mrb[0].mxu0
  %v1476 = vadd.f32 0.0, %v1475
  %v1477 = vpop.f32.mrb[0].mxu0
  %v1478 = vpop.f32.mrb[0].mxu0
  %v1479 = vadd.f32 0.0, %v1478
  %v1480 = vpop.f32.mrb[0].mxu0
  %1481 = vmatprep.mubr.bf16.mxu0 %v1150
  %1482 = vmatmul.mubr.bf16.gmra.mrb[0].mxu0 %v1149
  %v1483 = vpop.f32.mrb[0].mxu0
  %v1484 = vadd.f32 0.0, %v1483
  %v1485 = vpop.f32.mrb[0].mxu0
  %v1486 = vpop.f32.mrb[0].mxu0
  %v1487 = vadd.f32 0.0, %v1486
  %v1488 = vpop.f32.mrb[0].mxu0
  %1489 = vmatprep.mubr.bf16.mxu0 %v1154
  %1490 = vmatmul.mubr.bf16.gmra.mrb[0].mxu0 %v1153
  %v1491 = vpop.f32.mrb[0].mxu0
  %v1492 = vadd.f32 0.0, %v1491
  %v1493 = vpop.f32.mrb[0].mxu0
  %v1494 = vpop.f32.mrb[0].mxu0
  %v1495 = vadd.f32 0.0, %v1494
  %v1496 = vpop.f32.mrb[0].mxu0
  %1497 = vmatprep.mubr.bf16.mxu0 %v1158
  %1498 = vmatmul.mubr.bf16.gmra.mrb[0].mxu0 %v1157
  %v1499 = vpop.f32.mrb[0].mxu0
  %v1500 = vadd.f32 0.0, %v1499
  %v1501 = vpop.f32.mrb[0].mxu0
  %v1502 = vpop.f32.mrb[0].mxu0
  %v1503 = vadd.f32 0.0, %v1502
  %v1504 = vpop.f32.mrb[0].mxu0
  %1505 = vmatprep.mubr.bf16.mxu0 %v1162
  %1506 = vmatmul.mubr.bf16.gmra.mrb[0].mxu0 %v1161
  %v1507 = vpop.f32.mrb[0].mxu0
  %v1508 = vadd.f32 0.0, %v1507
  %v1509 = vpop.f32.mrb[0].mxu0
  %v1510 = vpop.f32.mrb[0].mxu0
  %v1511 = vadd.f32 0.0, %v1510
  %v1512 = vpop.f32.mrb[0].mxu0
  %1513 = vmatprep.mubr.bf16.mxu0 %v1166
  %1514 = vmatmul.mubr.bf16.gmra.mrb[0].mxu0 %v1165
  %v1515 = vpop.f32.mrb[0].mxu0
  %v1516 = vadd.f32 0.0, %v1515
  %v1517 = vpop.f32.mrb[0].mxu0
  %v1518 = vpop.f32.mrb[0].mxu0
  %v1519 = vadd.f32 0.0, %v1518
  %v1520 = vpop.f32.mrb[0].mxu0
  %1521 = vdwg.mxu0
  %1522 = vmatprep.subr.bf16.mxu0 0
  %1523 = vmatpush1.bf16.msra.mxu0 %v1377
  %1524 = vmatprep.subr.bf16.mxu0 0
  %1525 = vmatpush1.bf16.msra.mxu0 %v1378
  %1526 = vmatprep.subr.bf16.mxu0 0
  %1527 = vmatpush1.bf16.msra.mxu0 %v1379
  %1528 = vmatprep.subr.bf16.mxu0 0
  %1529 = vmatpush1.bf16.msra.mxu0 %v1380
  %1530 = vmatprep.subr.bf16.mxu0 0
  %1531 = vmatpush1.bf16.msra.mxu0 %v1381
  %1532 = vmatprep.subr.bf16.mxu0 0
  %1533 = vmatpush1.bf16.msra.mxu0 %v1382
  %1534 = vmatprep.subr.bf16.mxu0 0
  %1535 = vmatpush1.bf16.msra.mxu0 %v1383
  %1536 = vmatprep.subr.bf16.mxu0 0
  %1537 = vmatpush1.bf16.msra.mxu0 %v1384
  %1538 = vmatprep.subr.bf16.mxu0 0
  %1539 = vmatpush1.bf16.msra.mxu0 %v1385
  %1540 = vmatprep.subr.bf16.mxu0 0
  %1541 = vmatpush1.bf16.msra.mxu0 %v1386
  %1542 = vmatprep.subr.bf16.mxu0 0
  %1543 = vmatpush1.bf16.msra.mxu0 %v1387
  %1544 = vmatprep.subr.bf16.mxu0 0
  %1545 = vmatpush1.bf16.msra.mxu0 %v1388
  %1546 = vmatprep.subr.bf16.mxu0 0
  %1547 = vmatpush1.bf16.msra.mxu0 %v1389
  %1548 = vmatprep.subr.bf16.mxu0 0
  %1549 = vmatpush1.bf16.msra.mxu0 %v1390
  %1550 = vmatprep.subr.bf16.mxu0 0
  %1551 = vmatpush1.bf16.msra.mxu0 %v1391
  %1552 = vmatprep.subr.bf16.mxu0 0
  %1553 = vmatpush1.bf16.msra.mxu0 %v1392
  %1554 = vmatprep.mubr.bf16.mxu0 %v1140
  %1555 = vmatmul.mubr.bf16.gmra.mrb[0].mxu0 %v1139
  %v1556 = vpop.f32.mrb[0].mxu0
  %v1557 = vadd.f32 %v1460, %v1556
  %v1558 = vpop.f32.mrb[0].mxu0
  %v1559 = vpop.f32.mrb[0].mxu0
  %v1560 = vadd.f32 %v1463, %v1559
  %v1561 = vpop.f32.mrb[0].mxu0
  %1562 = vmatprep.mubr.bf16.mxu0 %v1144
  %1563 = vmatmul.mubr.bf16.gmra.mrb[0].mxu0 %v1143
  %v1564 = vpop.f32.mrb[0].mxu0
  %v1565 = vadd.f32 %v1468, %v1564
  %v1566 = vpop.f32.mrb[0].mxu0
  %v1567 = vpop.f32.mrb[0].mxu0
  %v1568 = vadd.f32 %v1471, %v1567
  %v1569 = vpop.f32.mrb[0].mxu0
  %1570 = vmatprep.mubr.bf16.mxu0 %v1148
  %1571 = vmatmul.mubr.bf16.gmra.mrb[0].mxu0 %v1147
  %v1572 = vpop.f32.mrb[0].mxu0
  %v1573 = vadd.f32 %v1476, %v1572
  %v1574 = vpop.f32.mrb[0].mxu0
  %v1575 = vpop.f32.mrb[0].mxu0
  %v1576 = vadd.f32 %v1479, %v1575
  %v1577 = vpop.f32.mrb[0].mxu0
  %1578 = vmatprep.mubr.bf16.mxu0 %v1152
  %1579 = vmatmul.mubr.bf16.gmra.mrb[0].mxu0 %v1151
  %v1580 = vpop.f32.mrb[0].mxu0
  %v1581 = vadd.f32 %v1484, %v1580
  %v1582 = vpop.f32.mrb[0].mxu0
  %v1583 = vpop.f32.mrb[0].mxu0
  %v1584 = vadd.f32 %v1487, %v1583
  %v1585 = vpop.f32.mrb[0].mxu0
  %1586 = vmatprep.mubr.bf16.mxu0 %v1156
  %1587 = vmatmul.mubr.bf16.gmra.mrb[0].mxu0 %v1155
  %v1588 = vpop.f32.mrb[0].mxu0
  %v1589 = vadd.f32 %v1492, %v1588
  %v1590 = vpop.f32.mrb[0].mxu0
  %v1591 = vpop.f32.mrb[0].mxu0
  %v1592 = vadd.f32 %v1495, %v1591
  %v1593 = vpop.f32.mrb[0].mxu0
  %1594 = vmatprep.mubr.bf16.mxu0 %v1160
  %1595 = vmatmul.mubr.bf16.gmra.mrb[0].mxu0 %v1159
  %v1596 = vpop.f32.mrb[0].mxu0
  %v1597 = vadd.f32 %v1500, %v1596
  %v1598 = vpop.f32.mrb[0].mxu0
  %v1599 = vpop.f32.mrb[0].mxu0
  %v1600 = vadd.f32 %v1503, %v1599
  %v1601 = vpop.f32.mrb[0].mxu0
  %1602 = vmatprep.mubr.bf16.mxu0 %v1164
  %1603 = vmatmul.mubr.bf16.gmra.mrb[0].mxu0 %v1163
  %v1604 = vpop.f32.mrb[0].mxu0
  %v1605 = vadd.f32 %v1508, %v1604
  %v1606 = vpop.f32.mrb[0].mxu0
  %v1607 = vpop.f32.mrb[0].mxu0
  %v1608 = vadd.f32 %v1511, %v1607
  %v1609 = vpop.f32.mrb[0].mxu0
  %1610 = vmatprep.mubr.bf16.mxu0 %v1168
  %1611 = vmatmul.mubr.bf16.gmra.mrb[0].mxu0 %v1167
  %v1612 = vpop.f32.mrb[0].mxu0
  %v1613 = vadd.f32 %v1516, %v1612
  %v1614 = vpop.f32.mrb[0].mxu0
  %v1615 = vpop.f32.mrb[0].mxu0
  %v1616 = vadd.f32 %v1519, %v1615
  %v1617 = vpop.f32.mrb[0].mxu0
  %1618 = vdwg.mxu0
  %v1619 = vadd.f32 %v1121, %v1557
  %v1620 = vadd.f32 %v1122, %v1560
  %v1621 = vadd.f32 %v1123, %v1565
  %v1622 = vadd.f32 %v1124, %v1568
  %v1623 = vadd.f32 %v1125, %v1573
  %v1624 = vadd.f32 %v1126, %v1576
  %v1625 = vadd.f32 %v1127, %v1581
  %v1626 = vadd.f32 %v1128, %v1584
  %v1627 = vadd.f32 %v1129, %v1589
  %v1628 = vadd.f32 %v1130, %v1592
  %v1629 = vadd.f32 %v1131, %v1597
  %v1630 = vadd.f32 %v1132, %v1600
  %v1631 = vadd.f32 %v1133, %v1605
  %v1632 = vadd.f32 %v1134, %v1608
  %v1633 = vadd.f32 %v1135, %v1613
  %v1634 = vadd.f32 %v1136, %v1616
  %1635 = vst [vmem:[#allocation2] sm:$0xff] %v1619
  %1636 = vst [vmem:[#allocation2 + $0x8] sm:$0xff] %v1620
  %1637 = vst [vmem:[#allocation2 + $0x10] sm:$0xff] %v1621
  %1638 = vst [vmem:[#allocation2 + $0x18] sm:$0xff] %v1622
  %1639 = vst [vmem:[#allocation2 + $0x20] sm:$0xff] %v1623
  %1640 = vst [vmem:[#allocation2 + $0x28] sm:$0xff] %v1624
  %1641 = vst [vmem:[#allocation2 + $0x30] sm:$0xff] %v1625
  %1642 = vst [vmem:[#allocation2 + $0x38] sm:$0xff] %v1626
  %1643 = vst [vmem:[#allocation2 + $0x40] sm:$0xff] %v1627
  %1644 = vst [vmem:[#allocation2 + $0x48] sm:$0xff] %v1628
  %1645 = vst [vmem:[#allocation2 + $0x50] sm:$0xff] %v1629
  %1646 = vst [vmem:[#allocation2 + $0x58] sm:$0xff] %v1630
  %1647 = vst [vmem:[#allocation2 + $0x60] sm:$0xff] %v1631
  %1648 = vst [vmem:[#allocation2 + $0x68] sm:$0xff] %v1632
  %1649 = vst [vmem:[#allocation2 + $0x70] sm:$0xff] %v1633
  %1650 = vst [vmem:[#allocation2 + $0x78] sm:$0xff] %v1634
  // Predicated region
  $region26: #{feed_forward.1} parent=0 // pred_check
    %p1651 = pneg %p21
  $region27: #{feed_forward.1} parent=0 // pred_check_branch
    %1653 = sbr.rel (%p1651) target = $region29
  $region28: #{feed_forward.1} parent=0 // pred_region
    %v1654 = vld [vmem:[#allocation2] sm:$0xff]
    %v1655 = vld [vmem:[#allocation2 + $0x8] sm:$0xff]
    %v1656 = vld [vmem:[#allocation2 + $0x10] sm:$0xff]
    %v1657 = vld [vmem:[#allocation2 + $0x18] sm:$0xff]
    %v1658 = vld [vmem:[#allocation2 + $0x20] sm:$0xff]
    %v1659 = vld [vmem:[#allocation2 + $0x28] sm:$0xff]
    %v1660 = vld [vmem:[#allocation2 + $0x30] sm:$0xff]
    %v1661 = vld [vmem:[#allocation2 + $0x38] sm:$0xff]
    %v1662 = vld [vmem:[#allocation2 + $0x40] sm:$0xff]
    %v1663 = vld [vmem:[#allocation2 + $0x48] sm:$0xff]
    %v1664 = vld [vmem:[#allocation2 + $0x50] sm:$0xff]
    %v1665 = vld [vmem:[#allocation2 + $0x58] sm:$0xff]
    %v1666 = vld [vmem:[#allocation2 + $0x60] sm:$0xff]
    %v1667 = vld [vmem:[#allocation2 + $0x68] sm:$0xff]
    %v1668 = vld [vmem:[#allocation2 + $0x70] sm:$0xff]
    %v1669 = vld [vmem:[#allocation2 + $0x78] sm:$0xff]
    %v1670 = vld [vmem:[%s4] sm:$0x1]
    %v1672 = vlaneseq
    %v1673 = vshrl.u32 %v1672, 7
    %v1674 = vsub.s32 0, %v1673
    %v1675 = vrot.slane %v1670, %v1674
    %v1677 = vadd.f32 %v1654, %v1675
    %v1678 = vadd.f32 %v1655, %v1675
    %v1679 = vadd.f32 %v1656, %v1675
    %v1680 = vadd.f32 %v1657, %v1675
    %v1681 = vadd.f32 %v1658, %v1675
    %v1682 = vadd.f32 %v1659, %v1675
    %v1683 = vadd.f32 %v1660, %v1675
    %v1684 = vadd.f32 %v1661, %v1675
    %v1685 = vadd.f32 %v1662, %v1675
    %v1686 = vadd.f32 %v1663, %v1675
    %v1687 = vadd.f32 %v1664, %v1675
    %v1688 = vadd.f32 %v1665, %v1675
    %v1689 = vadd.f32 %v1666, %v1675
    %v1690 = vadd.f32 %v1667, %v1675
    %v1691 = vadd.f32 %v1668, %v1675
    %v1692 = vadd.f32 %v1669, %v1675
    %1693 = vst [vmem:[%s5] sm:$0xff] %v1677
    %1694 = vst [vmem:[%s5 + $0x8] sm:$0xff] %v1678
    %1695 = vst [vmem:[%s5 + $0x10] sm:$0xff] %v1679
    %1696 = vst [vmem:[%s5 + $0x18] sm:$0xff] %v1680
    %1697 = vst [vmem:[%s5 + $0x20] sm:$0xff] %v1681
    %1698 = vst [vmem:[%s5 + $0x28] sm:$0xff] %v1682
    %1699 = vst [vmem:[%s5 + $0x30] sm:$0xff] %v1683
    %1700 = vst [vmem:[%s5 + $0x38] sm:$0xff] %v1684
    %1701 = vst [vmem:[%s5 + $0x40] sm:$0xff] %v1685
    %1702 = vst [vmem:[%s5 + $0x48] sm:$0xff] %v1686
    %1703 = vst [vmem:[%s5 + $0x50] sm:$0xff] %v1687
    %1704 = vst [vmem:[%s5 + $0x58] sm:$0xff] %v1688
    %1705 = vst [vmem:[%s5 + $0x60] sm:$0xff] %v1689
    %1706 = vst [vmem:[%s5 + $0x68] sm:$0xff] %v1690
    %1707 = vst [vmem:[%s5 + $0x70] sm:$0xff] %v1691
    %1708 = vst [vmem:[%s5 + $0x78] sm:$0xff] %v1692
  $region29: #{feed_forward.1} parent=0 // pred_fallthru
    _
  // Predicated region
  $region30: #{feed_forward.1} parent=0 // pred_check
    _
  $region31: #{feed_forward.1} parent=0 // pred_check_branch
    %1710 = sbr.rel (0) target = $region33
  $region32: #{feed_forward.1} parent=0 // pred_region
    _
  $region33: #{feed_forward.1} parent=0 // pred_fallthru
    _
  // Predicated region
  $region34: #{feed_forward.1} parent=0 // pred_check
    _
  $region35: #{feed_forward.1} parent=0 // pred_check_branch
    %1712 = sbr.rel (0) target = $region37
  $region36: #{feed_forward.1} parent=0 // pred_region
    _
  $region37: #{feed_forward.1} parent=0 // pred_fallthru
    _

</llo_original>
